<compile_context>
chip_gen: v7x
topology: tpu7x:2x2x1
jax: 0.10.0
libtpu: 0.0.40
codegen_flags: <defaults>
</compile_context>

<pallas_src>
import math
import functools
import jax
import jax.numpy as jnp
import numpy as np
from jax.experimental import pallas as pl
from jax.experimental.pallas import tpu as pltpu

# Small config consistent with SelfAttn(args): args.hid_dim=16, args.ffn_dim=32, args.nhead=4
HID_DIM = 16
FFN_DIM = 32
NHEAD = 4
B = 2
S = 8
N = B * S                 # flattened tokens processed in one kernel invocation
D = 2 * HID_DIM           # transformer model dim (32)
F = 2 * FFN_DIM           # ffn hidden dim (64)
HD = D // NHEAD           # per-head dim (8)
D_OUT = D // 2            # final fc output dim (16)
LANE = 128                # lane-dense padded width
LN_EPS = 1e-6

# --- row offsets inside the single packed parameter slab (all 8-aligned) ---
WQKV_R0 = 0               # (D, 3*D)      rows   0: 32, lanes 0:96
WO_R0 = 32                # (D, D)        rows  32: 64, lanes 0:32
W1_R0 = 64                # (D, F)        rows  64: 96, lanes 0:64
W2_R0 = 96                # (F, D)        rows  96:160, lanes 0:32
WFC_R0 = 160              # (D, LANE)     rows 160:192 (zero-padded past D_OUT)
MASK_R0 = 192             # (N, N)        rows 192:208, lanes 0:16
VEC_R0 = 208              # bias / LN vectors, one per row (see below)
SLAB_ROWS = 224


def _layer_norm(v, g, b):
    mu = jnp.mean(v, axis=-1, keepdims=True)
    var = jnp.mean((v - mu) ** 2, axis=-1, keepdims=True)
    return (v - mu) * jax.lax.rsqrt(var + LN_EPS) * g + b


def _dot_t(a, b):
    """a (m, d) contracted with b (n, d) on the last dim -> (m, n); no transpose op."""
    return jax.lax.dot_general(a, b, (((1,), (1,)), ((), ())),
                               preferred_element_type=jnp.float32)


def self_attn_kernel(x_ref, p_ref, out_ref):
    x = x_ref[...]                                                    # (N, D)

    # --- static slices of the single parameter slab (free, no extra DMAs) ---
    wqkv = p_ref[WQKV_R0:WQKV_R0 + D, 0:3 * D]                        # (D, 3D)
    wo = p_ref[WO_R0:WO_R0 + D, 0:D]                                  # (D, D)
    w1 = p_ref[W1_R0:W1_R0 + D, 0:F]                                  # (D, F)
    w2 = p_ref[W2_R0:W2_R0 + F, 0:D]                                  # (F, D)
    wfc = p_ref[WFC_R0:WFC_R0 + D, :]                                 # (D, LANE)
    mask = p_ref[MASK_R0:MASK_R0 + N, 0:N]                            # (N, N) additive
    ln1g = p_ref[VEC_R0 + 0:VEC_R0 + 1, 0:D]
    ln1b = p_ref[VEC_R0 + 1:VEC_R0 + 2, 0:D]
    ln2g = p_ref[VEC_R0 + 2:VEC_R0 + 3, 0:D]
    ln2b = p_ref[VEC_R0 + 3:VEC_R0 + 4, 0:D]
    bqkv = p_ref[VEC_R0 + 4:VEC_R0 + 5, 0:3 * D]
    bo = p_ref[VEC_R0 + 5:VEC_R0 + 6, 0:D]
    b1 = p_ref[VEC_R0 + 6:VEC_R0 + 7, 0:F]
    b2 = p_ref[VEC_R0 + 7:VEC_R0 + 8, 0:D]
    fcb = p_ref[VEC_R0 + 8:VEC_R0 + 9, :]                             # (1, LANE)

    # --- pre-norm multi-head self-attention + residual ---
    xn = _layer_norm(x, ln1g, ln1b)
    qkv = jnp.dot(xn, wqkv, preferred_element_type=jnp.float32) + bqkv  # (N, 3D)

    scale = 1.0 / math.sqrt(HD)
    ctx_heads = []
    for h in range(NHEAD):                                            # static unroll, 4 heads
        q = qkv[:, h * HD:(h + 1) * HD]
        k = qkv[:, D + h * HD:D + (h + 1) * HD]
        v = qkv[:, 2 * D + h * HD:2 * D + (h + 1) * HD]
        s = _dot_t(q, k) * scale + mask                               # (N, N)
        s = s - jnp.max(s, axis=-1, keepdims=True)
        p = jnp.exp(s)
        p = p / jnp.sum(p, axis=-1, keepdims=True)                    # exact softmax
        ctx_heads.append(jnp.dot(p, v, preferred_element_type=jnp.float32))
    ctx = jnp.concatenate(ctx_heads, axis=-1)                         # (N, D)
    x2 = x + jnp.dot(ctx, wo, preferred_element_type=jnp.float32) + bo  # dropout == identity

    # --- pre-norm positionwise feed-forward + residual ---
    x2n = _layer_norm(x2, ln2g, ln2b)
    h1 = jnp.maximum(
        jnp.dot(x2n, w1, preferred_element_type=jnp.float32) + b1, 0.0)
    z = x2 + jnp.dot(h1, w2, preferred_element_type=jnp.float32) + b2

    # --- final fc (D -> D//2), padded to 128 lanes for an unmasked lane-dense store ---
    out_ref[...] = jnp.dot(z, wfc, preferred_element_type=jnp.float32) + fcb


def init_params(key):
    """Deterministic synthetic parameters.  Linears stored as (in, out); biases as (1, out)."""
    ks = jax.random.split(key, 20)

    def lin(kw, kb, din, dout):
        w = jax.random.normal(kw, (din, dout), jnp.float32) / math.sqrt(din)
        b = 0.02 * jax.random.normal(kb, (1, dout), jnp.float32)
        return w, b

    wq, bq = lin(ks[0], ks[1], D, D)
    wk, bk = lin(ks[2], ks[3], D, D)
    wv, bv = lin(ks[4], ks[5], D, D)
    wo, bo = lin(ks[6], ks[7], D, D)
    ln1g = jnp.ones((1, D), jnp.float32)
    ln1b = jnp.zeros((1, D), jnp.float32)
    w1, b1 = lin(ks[8], ks[9], D, F)
    w2, b2 = lin(ks[10], ks[11], F, D)
    ln2g = jnp.ones((1, D), jnp.float32)
    ln2b = jnp.zeros((1, D), jnp.float32)
    fcw, fcb = lin(ks[12], ks[13], D, D_OUT)
    return [wq, bq, wk, bk, wv, bv, wo, bo, ln1g, ln1b,
            w1, b1, w2, b2, ln2g, ln2b, fcw, fcb]


def pack_params(params):
    """Repack all 18 tensors + the constant attention mask into ONE (224, 128) f32 slab.

    Done ONCE (outside the per-call path); the slab stays resident on device.
    """
    (wq, bq, wk, bk, wv, bv, wo, bo, ln1g, ln1b,
     w1, b1, w2, b2, ln2g, ln2b, fcw, fcb) = params

    def pad_rows(a):
        r, c = a.shape
        return jnp.zeros((r, LANE), jnp.float32).at[:, :c].set(a)

    wqkv = jnp.concatenate([wq, wk, wv], axis=1)                      # (D, 3D)
    bqkv = jnp.concatenate([bq, bk, bv], axis=1)                      # (1, 3D)

    # compile-time block-diagonal additive mask (tokens attend within their batch element)
    rb = np.arange(N)[:, None] // S
    cb = np.arange(N)[None, :] // S
    mask = jnp.asarray(np.where(rb == cb, 0.0, -1e30).astype(np.float32))  # (N, N)

    vec_rows = [ln1g, ln1b, ln2g, ln2b, bqkv, bo, b1, b2, fcb]
    vec = jnp.concatenate([pad_rows(v) for v in vec_rows], axis=0)    # (9, LANE)
    vec = jnp.concatenate(
        [vec, jnp.zeros((16 - vec.shape[0], LANE), jnp.float32)], axis=0)  # (16, LANE)

    slab = jnp.concatenate([
        pad_rows(wqkv),        # rows   0: 32
        pad_rows(wo),          # rows  32: 64
        pad_rows(w1),          # rows  64: 96
        pad_rows(w2),          # rows  96:160
        pad_rows(fcw),         # rows 160:192  (fc weight zero-padded to 128 lanes)
        pad_rows(mask),        # rows 192:208
        vec,                   # rows 208:224
    ], axis=0)
    assert slab.shape == (SLAB_ROWS, LANE)
    return slab


_COST = pl.CostEstimate(
    flops=2 * (N * D * 3 * D            # qkv projection
               + 2 * NHEAD * N * N * HD  # scores + context
               + N * D * D               # output projection
               + N * D * F + N * F * D   # ffn
               + N * D * LANE),          # padded fc
    transcendentals=NHEAD * N * N + 2 * 2 * N,   # exps + LN rsqrts
    bytes_accessed=4 * (N * D + SLAB_ROWS * LANE + N * LANE),
)


@jax.jit
def self_attn_forward(audio, video, param_slab):
    # wrapper-side concat fuses into the surrounding graph under jit (one dispatch total)
    x = jnp.concatenate([audio, video], axis=-1).reshape(N, D)

    vmem = pl.BlockSpec(memory_space=pltpu.MemorySpace.VMEM)
    out = pl.pallas_call(
        self_attn_kernel,
        out_shape=jax.ShapeDtypeStruct((N, LANE), jnp.float32),
        in_specs=[vmem, vmem],
        out_specs=vmem,
        cost_estimate=_COST,
    )(x, param_slab)
    # slice the lane-padded output back to D//2 and restore (B, S, D_OUT)
    return out[:, :D_OUT].reshape(B, S, D_OUT)


def reference(x, params):
    (wq, bq, wk, bk, wv, bv, wo, bo, ln1g, ln1b,
     w1, b1, w2, b2, ln2g, ln2b, fcw, fcb) = params

    def ln(v, g, b):
        mu = v.mean(-1, keepdims=True)
        var = ((v - mu) ** 2).mean(-1, keepdims=True)
        return (v - mu) * jax.lax.rsqrt(var + LN_EPS) * g + b

    xn = ln(x, ln1g, ln1b)
    q = xn @ wq + bq
    k = xn @ wk + bk
    v = xn @ wv + bv
    qh = q.reshape(B, S, NHEAD, HD).transpose(0, 2, 1, 3)
    kh = k.reshape(B, S, NHEAD, HD).transpose(0, 2, 1, 3)
    vh = v.reshape(B, S, NHEAD, HD).transpose(0, 2, 1, 3)
    s = jnp.einsum('bhqd,bhkd->bhqk', qh, kh) / math.sqrt(HD)
    p = jax.nn.softmax(s, axis=-1)
    ctx = jnp.einsum('bhqk,bhkd->bhqd', p, vh).transpose(0, 2, 1, 3).reshape(B, S, D)
    x2 = x + (ctx @ wo + bo)
    x2n = ln(x2, ln2g, ln2b)
    h1 = jax.nn.relu(x2n @ w1 + b1)
    z = x2 + (h1 @ w2 + b2)
    return z @ fcw + fcb


if __name__ == "__main__":
    key = jax.random.PRNGKey(0)
    k_a, k_v, k_p = jax.random.split(key, 3)
    audio = jax.random.normal(k_a, (B, S, HID_DIM), jnp.float32)
    video = jax.random.normal(k_v, (B, S, HID_DIM), jnp.float32)
    params = init_params(k_p)

    # pack once, keep resident on device (NOT in the per-call path)
    param_slab = jax.block_until_ready(pack_params(params))

    out = self_attn_forward(audio, video, param_slab)
    jax.block_until_ready(out)

    ref = reference(jnp.concatenate([audio, video], axis=-1), params)
    # exact softmax division now -> tight tolerance again
    np.testing.assert_allclose(np.asarray(out), np.asarray(ref), atol=1e-3, rtol=1e-3)
    print("KERNEL_OK")
</pallas_src>

<mosaic_0001>
module attributes {stable_mosaic.version = 11 : i64} {
  func.func @self_attn_kernel(%arg0: memref<16x32xf32, #tpu.memory_space<vmem>>, %arg1: memref<224x128xf32, #tpu.memory_space<vmem>>, %arg2: memref<16x128xf32, #tpu.memory_space<vmem>>) attributes {dimension_semantics = [], scalar_prefetch = 0 : i64, scratch_operands = 0 : i64, tpu.core_type = #tpu.core_type<tc>} {
    %c0 = arith.constant 0 : index
    %c0_0 = arith.constant 0 : index
    %0 = vector.load %arg0[%c0, %c0_0] : memref<16x32xf32, #tpu.memory_space<vmem>>, vector<16x32xf32>
    %c0_1 = arith.constant 0 : index
    %c0_2 = arith.constant 0 : index
    %1 = vector.load %arg1[%c0_1, %c0_2] : memref<224x128xf32, #tpu.memory_space<vmem>>, vector<32x96xf32>
    %c32 = arith.constant 32 : index
    %c0_3 = arith.constant 0 : index
    %2 = vector.load %arg1[%c32, %c0_3] : memref<224x128xf32, #tpu.memory_space<vmem>>, vector<32x32xf32>
    %c64 = arith.constant 64 : index
    %c0_4 = arith.constant 0 : index
    %3 = vector.load %arg1[%c64, %c0_4] : memref<224x128xf32, #tpu.memory_space<vmem>>, vector<32x64xf32>
    %c96 = arith.constant 96 : index
    %c0_5 = arith.constant 0 : index
    %4 = vector.load %arg1[%c96, %c0_5] : memref<224x128xf32, #tpu.memory_space<vmem>>, vector<64x32xf32>
    %c160 = arith.constant 160 : index
    %c0_6 = arith.constant 0 : index
    %5 = vector.load %arg1[%c160, %c0_6] : memref<224x128xf32, #tpu.memory_space<vmem>>, vector<32x128xf32>
    %c192 = arith.constant 192 : index
    %c0_7 = arith.constant 0 : index
    %6 = vector.load %arg1[%c192, %c0_7] : memref<224x128xf32, #tpu.memory_space<vmem>>, vector<16x16xf32>
    %c208 = arith.constant 208 : index
    %c0_8 = arith.constant 0 : index
    %7 = vector.load %arg1[%c208, %c0_8] : memref<224x128xf32, #tpu.memory_space<vmem>>, vector<1x32xf32>
    %c209 = arith.constant 209 : index
    %c0_9 = arith.constant 0 : index
    %8 = vector.load %arg1[%c209, %c0_9] : memref<224x128xf32, #tpu.memory_space<vmem>>, vector<1x32xf32>
    %c210 = arith.constant 210 : index
    %c0_10 = arith.constant 0 : index
    %9 = vector.load %arg1[%c210, %c0_10] : memref<224x128xf32, #tpu.memory_space<vmem>>, vector<1x32xf32>
    %c211 = arith.constant 211 : index
    %c0_11 = arith.constant 0 : index
    %10 = vector.load %arg1[%c211, %c0_11] : memref<224x128xf32, #tpu.memory_space<vmem>>, vector<1x32xf32>
    %c212 = arith.constant 212 : index
    %c0_12 = arith.constant 0 : index
    %11 = vector.load %arg1[%c212, %c0_12] : memref<224x128xf32, #tpu.memory_space<vmem>>, vector<1x96xf32>
    %c213 = arith.constant 213 : index
    %c0_13 = arith.constant 0 : index
    %12 = vector.load %arg1[%c213, %c0_13] : memref<224x128xf32, #tpu.memory_space<vmem>>, vector<1x32xf32>
    %c214 = arith.constant 214 : index
    %c0_14 = arith.constant 0 : index
    %13 = vector.load %arg1[%c214, %c0_14] : memref<224x128xf32, #tpu.memory_space<vmem>>, vector<1x64xf32>
    %c215 = arith.constant 215 : index
    %c0_15 = arith.constant 0 : index
    %14 = vector.load %arg1[%c215, %c0_15] : memref<224x128xf32, #tpu.memory_space<vmem>>, vector<1x32xf32>
    %c216 = arith.constant 216 : index
    %c0_16 = arith.constant 0 : index
    %15 = vector.load %arg1[%c216, %c0_16] : memref<224x128xf32, #tpu.memory_space<vmem>>, vector<1x128xf32>
    %cst = arith.constant dense<0.000000e+00> : vector<16xf32>
    %16 = vector.multi_reduction <add>, %0, %cst [1] : vector<16x32xf32> to vector<16xf32>
    %17 = vector.shape_cast %16 : vector<16xf32> to vector<16x1xf32>
    %cst_17 = arith.constant 3.200000e+01 : f32
    %18 = vector.broadcast %cst_17 : f32 to vector<16x1xf32>
    %19 = arith.divf %17, %18 : vector<16x1xf32>
    %20 = vector.broadcast %19 : vector<16x1xf32> to vector<16x32xf32>
    %21 = arith.subf %0, %20 : vector<16x32xf32>
    %22 = arith.mulf %21, %21 : vector<16x32xf32>
    %cst_18 = arith.constant dense<0.000000e+00> : vector<16xf32>
    %23 = vector.multi_reduction <add>, %22, %cst_18 [1] : vector<16x32xf32> to vector<16xf32>
    %24 = vector.shape_cast %23 : vector<16xf32> to vector<16x1xf32>
    %cst_19 = arith.constant 3.200000e+01 : f32
    %25 = vector.broadcast %cst_19 : f32 to vector<16x1xf32>
    %26 = arith.divf %24, %25 : vector<16x1xf32>
    %27 = vector.broadcast %19 : vector<16x1xf32> to vector<16x32xf32>
    %28 = arith.subf %0, %27 : vector<16x32xf32>
    %cst_20 = arith.constant 9.99999997E-7 : f32
    %29 = vector.broadcast %cst_20 : f32 to vector<16x1xf32>
    %30 = arith.addf %26, %29 : vector<16x1xf32>
    %31 = math.rsqrt %30 : vector<16x1xf32>
    %32 = vector.broadcast %31 : vector<16x1xf32> to vector<16x32xf32>
    %33 = arith.mulf %28, %32 : vector<16x32xf32>
    %34 = vector.broadcast %7 : vector<1x32xf32> to vector<16x32xf32>
    %35 = arith.mulf %33, %34 : vector<16x32xf32>
    %36 = vector.broadcast %8 : vector<1x32xf32> to vector<16x32xf32>
    %37 = arith.addf %35, %36 : vector<16x32xf32>
    %cst_21 = arith.constant dense<0.000000e+00> : vector<16x96xf32>
    %38 = tpu.matmul %37, %1, %cst_21 {dimension_numbers = #tpu.dot_dimension_numbers<[1], [0], [0], [1], [0, 0, 1, 1], [], []>} : vector<16x32xf32>, vector<32x96xf32>, vector<16x96xf32> -> vector<16x96xf32>
    %39 = vector.broadcast %11 : vector<1x96xf32> to vector<16x96xf32>
    %40 = arith.addf %38, %39 : vector<16x96xf32>
    %41 = vector.extract_strided_slice %40 {offsets = [0, 0], sizes = [16, 8], strides = [1, 1]} : vector<16x96xf32> to vector<16x8xf32>
    %42 = vector.extract_strided_slice %40 {offsets = [0, 32], sizes = [16, 8], strides = [1, 1]} : vector<16x96xf32> to vector<16x8xf32>
    %43 = vector.extract_strided_slice %40 {offsets = [0, 64], sizes = [16, 8], strides = [1, 1]} : vector<16x96xf32> to vector<16x8xf32>
    %cst_22 = arith.constant dense<0.000000e+00> : vector<16x16xf32>
    %44 = tpu.matmul %41, %42, %cst_22 {dimension_numbers = #tpu.dot_dimension_numbers<[1], [1], [0], [0], [0, 0, 1, 0], [], []>} : vector<16x8xf32>, vector<16x8xf32>, vector<16x16xf32> -> vector<16x16xf32>
    %cst_23 = arith.constant 0.353553385 : f32
    %45 = vector.broadcast %cst_23 : f32 to vector<16x16xf32>
    %46 = arith.mulf %44, %45 : vector<16x16xf32>
    %47 = arith.addf %46, %6 : vector<16x16xf32>
    %cst_24 = arith.constant dense<0xFF800000> : vector<16xf32>
    %48 = vector.multi_reduction <maximumf>, %47, %cst_24 [1] : vector<16x16xf32> to vector<16xf32>
    %49 = vector.shape_cast %48 : vector<16xf32> to vector<16x1xf32>
    %50 = vector.broadcast %49 : vector<16x1xf32> to vector<16x16xf32>
    %51 = arith.subf %47, %50 : vector<16x16xf32>
    %52 = math.exp %51 : vector<16x16xf32>
    %cst_25 = arith.constant dense<0.000000e+00> : vector<16xf32>
    %53 = vector.multi_reduction <add>, %52, %cst_25 [1] : vector<16x16xf32> to vector<16xf32>
    %54 = vector.shape_cast %53 : vector<16xf32> to vector<16x1xf32>
    %55 = vector.broadcast %54 : vector<16x1xf32> to vector<16x16xf32>
    %56 = arith.divf %52, %55 : vector<16x16xf32>
    %cst_26 = arith.constant dense<0.000000e+00> : vector<16x8xf32>
    %57 = tpu.matmul %56, %43, %cst_26 {dimension_numbers = #tpu.dot_dimension_numbers<[1], [0], [0], [1], [0, 0, 1, 1], [], []>} : vector<16x16xf32>, vector<16x8xf32>, vector<16x8xf32> -> vector<16x8xf32>
    %58 = vector.extract_strided_slice %40 {offsets = [0, 8], sizes = [16, 8], strides = [1, 1]} : vector<16x96xf32> to vector<16x8xf32>
    %59 = vector.extract_strided_slice %40 {offsets = [0, 40], sizes = [16, 8], strides = [1, 1]} : vector<16x96xf32> to vector<16x8xf32>
    %60 = vector.extract_strided_slice %40 {offsets = [0, 72], sizes = [16, 8], strides = [1, 1]} : vector<16x96xf32> to vector<16x8xf32>
    %cst_27 = arith.constant dense<0.000000e+00> : vector<16x16xf32>
    %61 = tpu.matmul %58, %59, %cst_27 {dimension_numbers = #tpu.dot_dimension_numbers<[1], [1], [0], [0], [0, 0, 1, 0], [], []>} : vector<16x8xf32>, vector<16x8xf32>, vector<16x16xf32> -> vector<16x16xf32>
    %cst_28 = arith.constant 0.353553385 : f32
    %62 = vector.broadcast %cst_28 : f32 to vector<16x16xf32>
    %63 = arith.mulf %61, %62 : vector<16x16xf32>
    %64 = arith.addf %63, %6 : vector<16x16xf32>
    %cst_29 = arith.constant dense<0xFF800000> : vector<16xf32>
    %65 = vector.multi_reduction <maximumf>, %64, %cst_29 [1] : vector<16x16xf32> to vector<16xf32>
    %66 = vector.shape_cast %65 : vector<16xf32> to vector<16x1xf32>
    %67 = vector.broadcast %66 : vector<16x1xf32> to vector<16x16xf32>
    %68 = arith.subf %64, %67 : vector<16x16xf32>
    %69 = math.exp %68 : vector<16x16xf32>
    %cst_30 = arith.constant dense<0.000000e+00> : vector<16xf32>
    %70 = vector.multi_reduction <add>, %69, %cst_30 [1] : vector<16x16xf32> to vector<16xf32>
    %71 = vector.shape_cast %70 : vector<16xf32> to vector<16x1xf32>
    %72 = vector.broadcast %71 : vector<16x1xf32> to vector<16x16xf32>
    %73 = arith.divf %69, %72 : vector<16x16xf32>
    %cst_31 = arith.constant dense<0.000000e+00> : vector<16x8xf32>
    %74 = tpu.matmul %73, %60, %cst_31 {dimension_numbers = #tpu.dot_dimension_numbers<[1], [0], [0], [1], [0, 0, 1, 1], [], []>} : vector<16x16xf32>, vector<16x8xf32>, vector<16x8xf32> -> vector<16x8xf32>
    %75 = vector.extract_strided_slice %40 {offsets = [0, 16], sizes = [16, 8], strides = [1, 1]} : vector<16x96xf32> to vector<16x8xf32>
    %76 = vector.extract_strided_slice %40 {offsets = [0, 48], sizes = [16, 8], strides = [1, 1]} : vector<16x96xf32> to vector<16x8xf32>
    %77 = vector.extract_strided_slice %40 {offsets = [0, 80], sizes = [16, 8], strides = [1, 1]} : vector<16x96xf32> to vector<16x8xf32>
    %cst_32 = arith.constant dense<0.000000e+00> : vector<16x16xf32>
    %78 = tpu.matmul %75, %76, %cst_32 {dimension_numbers = #tpu.dot_dimension_numbers<[1], [1], [0], [0], [0, 0, 1, 0], [], []>} : vector<16x8xf32>, vector<16x8xf32>, vector<16x16xf32> -> vector<16x16xf32>
    %cst_33 = arith.constant 0.353553385 : f32
    %79 = vector.broadcast %cst_33 : f32 to vector<16x16xf32>
    %80 = arith.mulf %78, %79 : vector<16x16xf32>
    %81 = arith.addf %80, %6 : vector<16x16xf32>
    %cst_34 = arith.constant dense<0xFF800000> : vector<16xf32>
    %82 = vector.multi_reduction <maximumf>, %81, %cst_34 [1] : vector<16x16xf32> to vector<16xf32>
    %83 = vector.shape_cast %82 : vector<16xf32> to vector<16x1xf32>
    %84 = vector.broadcast %83 : vector<16x1xf32> to vector<16x16xf32>
    %85 = arith.subf %81, %84 : vector<16x16xf32>
    %86 = math.exp %85 : vector<16x16xf32>
    %cst_35 = arith.constant dense<0.000000e+00> : vector<16xf32>
    %87 = vector.multi_reduction <add>, %86, %cst_35 [1] : vector<16x16xf32> to vector<16xf32>
    %88 = vector.shape_cast %87 : vector<16xf32> to vector<16x1xf32>
    %89 = vector.broadcast %88 : vector<16x1xf32> to vector<16x16xf32>
    %90 = arith.divf %86, %89 : vector<16x16xf32>
    %cst_36 = arith.constant dense<0.000000e+00> : vector<16x8xf32>
    %91 = tpu.matmul %90, %77, %cst_36 {dimension_numbers = #tpu.dot_dimension_numbers<[1], [0], [0], [1], [0, 0, 1, 1], [], []>} : vector<16x16xf32>, vector<16x8xf32>, vector<16x8xf32> -> vector<16x8xf32>
    %92 = vector.extract_strided_slice %40 {offsets = [0, 24], sizes = [16, 8], strides = [1, 1]} : vector<16x96xf32> to vector<16x8xf32>
    %93 = vector.extract_strided_slice %40 {offsets = [0, 56], sizes = [16, 8], strides = [1, 1]} : vector<16x96xf32> to vector<16x8xf32>
    %94 = vector.extract_strided_slice %40 {offsets = [0, 88], sizes = [16, 8], strides = [1, 1]} : vector<16x96xf32> to vector<16x8xf32>
    %cst_37 = arith.constant dense<0.000000e+00> : vector<16x16xf32>
    %95 = tpu.matmul %92, %93, %cst_37 {dimension_numbers = #tpu.dot_dimension_numbers<[1], [1], [0], [0], [0, 0, 1, 0], [], []>} : vector<16x8xf32>, vector<16x8xf32>, vector<16x16xf32> -> vector<16x16xf32>
    %cst_38 = arith.constant 0.353553385 : f32
    %96 = vector.broadcast %cst_38 : f32 to vector<16x16xf32>
    %97 = arith.mulf %95, %96 : vector<16x16xf32>
    %98 = arith.addf %97, %6 : vector<16x16xf32>
    %cst_39 = arith.constant dense<0xFF800000> : vector<16xf32>
    %99 = vector.multi_reduction <maximumf>, %98, %cst_39 [1] : vector<16x16xf32> to vector<16xf32>
    %100 = vector.shape_cast %99 : vector<16xf32> to vector<16x1xf32>
    %101 = vector.broadcast %100 : vector<16x1xf32> to vector<16x16xf32>
    %102 = arith.subf %98, %101 : vector<16x16xf32>
    %103 = math.exp %102 : vector<16x16xf32>
    %cst_40 = arith.constant dense<0.000000e+00> : vector<16xf32>
    %104 = vector.multi_reduction <add>, %103, %cst_40 [1] : vector<16x16xf32> to vector<16xf32>
    %105 = vector.shape_cast %104 : vector<16xf32> to vector<16x1xf32>
    %106 = vector.broadcast %105 : vector<16x1xf32> to vector<16x16xf32>
    %107 = arith.divf %103, %106 : vector<16x16xf32>
    %cst_41 = arith.constant dense<0.000000e+00> : vector<16x8xf32>
    %108 = tpu.matmul %107, %94, %cst_41 {dimension_numbers = #tpu.dot_dimension_numbers<[1], [0], [0], [1], [0, 0, 1, 1], [], []>} : vector<16x16xf32>, vector<16x8xf32>, vector<16x8xf32> -> vector<16x8xf32>
    %109 = tpu.concatenate %57, %74, %91, %108 in 1 : vector<16x8xf32>, vector<16x8xf32>, vector<16x8xf32>, vector<16x8xf32> -> vector<16x32xf32>
    %cst_42 = arith.constant dense<0.000000e+00> : vector<16x32xf32>
    %110 = tpu.matmul %109, %2, %cst_42 {dimension_numbers = #tpu.dot_dimension_numbers<[1], [0], [0], [1], [0, 0, 1, 1], [], []>} : vector<16x32xf32>, vector<32x32xf32>, vector<16x32xf32> -> vector<16x32xf32>
    %111 = arith.addf %0, %110 : vector<16x32xf32>
    %112 = vector.broadcast %12 : vector<1x32xf32> to vector<16x32xf32>
    %113 = arith.addf %111, %112 : vector<16x32xf32>
    %cst_43 = arith.constant dense<0.000000e+00> : vector<16xf32>
    %114 = vector.multi_reduction <add>, %113, %cst_43 [1] : vector<16x32xf32> to vector<16xf32>
    %115 = vector.shape_cast %114 : vector<16xf32> to vector<16x1xf32>
    %cst_44 = arith.constant 3.200000e+01 : f32
    %116 = vector.broadcast %cst_44 : f32 to vector<16x1xf32>
    %117 = arith.divf %115, %116 : vector<16x1xf32>
    %118 = vector.broadcast %117 : vector<16x1xf32> to vector<16x32xf32>
    %119 = arith.subf %113, %118 : vector<16x32xf32>
    %120 = arith.mulf %119, %119 : vector<16x32xf32>
    %cst_45 = arith.constant dense<0.000000e+00> : vector<16xf32>
    %121 = vector.multi_reduction <add>, %120, %cst_45 [1] : vector<16x32xf32> to vector<16xf32>
    %122 = vector.shape_cast %121 : vector<16xf32> to vector<16x1xf32>
    %cst_46 = arith.constant 3.200000e+01 : f32
    %123 = vector.broadcast %cst_46 : f32 to vector<16x1xf32>
    %124 = arith.divf %122, %123 : vector<16x1xf32>
    %125 = vector.broadcast %117 : vector<16x1xf32> to vector<16x32xf32>
    %126 = arith.subf %113, %125 : vector<16x32xf32>
    %cst_47 = arith.constant 9.99999997E-7 : f32
    %127 = vector.broadcast %cst_47 : f32 to vector<16x1xf32>
    %128 = arith.addf %124, %127 : vector<16x1xf32>
    %129 = math.rsqrt %128 : vector<16x1xf32>
    %130 = vector.broadcast %129 : vector<16x1xf32> to vector<16x32xf32>
    %131 = arith.mulf %126, %130 : vector<16x32xf32>
    %132 = vector.broadcast %9 : vector<1x32xf32> to vector<16x32xf32>
    %133 = arith.mulf %131, %132 : vector<16x32xf32>
    %134 = vector.broadcast %10 : vector<1x32xf32> to vector<16x32xf32>
    %135 = arith.addf %133, %134 : vector<16x32xf32>
    %cst_48 = arith.constant dense<0.000000e+00> : vector<16x64xf32>
    %136 = tpu.matmul %135, %3, %cst_48 {dimension_numbers = #tpu.dot_dimension_numbers<[1], [0], [0], [1], [0, 0, 1, 1], [], []>} : vector<16x32xf32>, vector<32x64xf32>, vector<16x64xf32> -> vector<16x64xf32>
    %137 = vector.broadcast %13 : vector<1x64xf32> to vector<16x64xf32>
    %138 = arith.addf %136, %137 : vector<16x64xf32>
    %cst_49 = arith.constant 0.000000e+00 : f32
    %139 = vector.broadcast %cst_49 : f32 to vector<16x64xf32>
    %140 = arith.maximumf %138, %139 : vector<16x64xf32>
    %cst_50 = arith.constant dense<0.000000e+00> : vector<16x32xf32>
    %141 = tpu.matmul %140, %4, %cst_50 {dimension_numbers = #tpu.dot_dimension_numbers<[1], [0], [0], [1], [0, 0, 1, 1], [], []>} : vector<16x64xf32>, vector<64x32xf32>, vector<16x32xf32> -> vector<16x32xf32>
    %142 = arith.addf %113, %141 : vector<16x32xf32>
    %143 = vector.broadcast %14 : vector<1x32xf32> to vector<16x32xf32>
    %144 = arith.addf %142, %143 : vector<16x32xf32>
    %cst_51 = arith.constant dense<0.000000e+00> : vector<16x128xf32>
    %145 = tpu.matmul %144, %5, %cst_51 {dimension_numbers = #tpu.dot_dimension_numbers<[1], [0], [0], [1], [0, 0, 1, 1], [], []>} : vector<16x32xf32>, vector<32x128xf32>, vector<16x128xf32> -> vector<16x128xf32>
    %146 = vector.broadcast %15 : vector<1x128xf32> to vector<16x128xf32>
    %147 = arith.addf %145, %146 : vector<16x128xf32>
    %c0_52 = arith.constant 0 : index
    %c0_53 = arith.constant 0 : index
    %148 = vector.load %arg2[%c0_52, %c0_53] : memref<16x128xf32, #tpu.memory_space<vmem>>, vector<16x128xf32>
    tpu.vector_store %arg2[%c0_52, %c0_53], %147 {strides = array<i32>} : memref<16x128xf32, #tpu.memory_space<vmem>>, vector<16x128xf32>,
    return
  }
}

</mosaic_0001>

<llo_original>
// kernel: self_attn_forward.1
$region0: #{self_attn_forward.1}
  #allocation0 [shape = 'u32[]', space=smem, size = 0x4, offset = 0x4, fixed_abs, tag = 'smem constant byte address 0x4 - core index']
  #allocation1 [shape = 'u32[144,128]{1,0:T(1,128)}', space=vmem, size = 0x12000, scoped, tag = 'internal scratch']
  %s0 = inlined_call_operand.vmem [shape: f32[16,32], index: 0, kind: input, shape index: {}]
  %s1 = inlined_call_operand.hbm [shape: f32[224,128], index: 1, kind: input, shape index: {}]
  %s2 = inlined_call_operand.vmem [shape: f32[16,128], index: 2, kind: output, shape index: {}]
  %s3 = sld [smem:[#allocation0]]
  $region22: #{self_attn_forward.1} parent=0
    _
  %s5 = ssub.s32 1, %s3
  %s6 = scalar_select 0, %s5, %s3
  $region1: #{self_attn_forward.1} parent=0
    #allocation2 [shape = 'u8[114688]{0}', space=vmem, size = 0x1c000, scoped, tag = 'input window, operand 1, single buffered']
    #allocation3 [shape = 's32[1]{0}', space=sflag, size = 0x4, scoped, tag = 'scoped memory for self_attn_forward.1']
    %7 = vsyncpa [#allocation3], 0
    // Predicated region
    $region2: #{self_attn_forward.1} parent=1 // pred_check
      _
    $region3: #{self_attn_forward.1} parent=1 // pred_check_branch
      %9 = sbr.rel (0) target = $region5
    $region4: #{self_attn_forward.1} parent=1 // pred_region
      _
    $region5: #{self_attn_forward.1} parent=1 // pred_fallthru
      _
    // Predicated region
    $region6: #{self_attn_forward.1} parent=1 // pred_check
      _
    $region7: #{self_attn_forward.1} parent=1 // pred_check_branch
      %11 = sbr.rel (0) target = $region9
    $region8: #{self_attn_forward.1} parent=1 // pred_region
      %s13 = ssub.s32 3584, 3584
      %14 = vsyncadd [#allocation3], %s13
      %s15 = sshll.u32 [#allocation2], 4
      %s16 = int_to_ptr.vmem [resolvable:$true] %s15
      %21 = dma.hbm_to_vmem [thread:$0]  %s1, 3584, %s16, [#allocation3], 128, 128, 8
    $region9: #{self_attn_forward.1} parent=1 // pred_fallthru
      _
    // Predicated region
    $region10: #{self_attn_forward.1} parent=1 // pred_check
      _
    $region11: #{self_attn_forward.1} parent=1 // pred_check_branch
      %23 = sbr.rel (0) target = $region13
    $region12: #{self_attn_forward.1} parent=1 // pred_region
      %24 = dma.done [#allocation3], 3584
    $region13: #{self_attn_forward.1} parent=1 // pred_fallthru
      _
    %v25 = vld [vmem:[%s0] sm:$0xff]
    %v26 = vld [vmem:[%s0 + $0x8] sm:$0xff]
    %v27 = vld [vmem:[#allocation2] sm:$0xff]
    %v28 = vld [vmem:[#allocation2 + $0x8] sm:$0xff]
    %v29 = vld [vmem:[#allocation2 + $0x10] sm:$0xff]
    %v30 = vld [vmem:[#allocation2 + $0x18] sm:$0xff]
    %v31 = vld [vmem:[#allocation2 + $0x20] sm:$0xff]
    %v32 = vld [vmem:[#allocation2 + $0x28] sm:$0xff]
    %v33 = vld [vmem:[#allocation2 + $0x30] sm:$0xff]
    %v34 = vld [vmem:[#allocation2 + $0x38] sm:$0xff]
    %v35 = vld [vmem:[#allocation2 + $0x40] sm:$0xff]
    %v36 = vld [vmem:[#allocation2 + $0x48] sm:$0xff]
    %v37 = vld [vmem:[#allocation2 + $0x50] sm:$0xff]
    %v38 = vld [vmem:[#allocation2 + $0x58] sm:$0xff]
    %v39 = vld [vmem:[#allocation2 + $0x60] sm:$0xff]
    %v40 = vld [vmem:[#allocation2 + $0x68] sm:$0xff]
    %v41 = vld [vmem:[#allocation2 + $0x70] sm:$0xff]
    %v42 = vld [vmem:[#allocation2 + $0x78] sm:$0xff]
    %v43 = vld [vmem:[#allocation2 + $0x80] sm:$0xff]
    %v44 = vld [vmem:[#allocation2 + $0x88] sm:$0xff]
    %v45 = vld [vmem:[#allocation2 + $0x90] sm:$0xff]
    %v46 = vld [vmem:[#allocation2 + $0x98] sm:$0xff]
    %v47 = vld [vmem:[#allocation2 + $0xa0] sm:$0xff]
    %v48 = vld [vmem:[#allocation2 + $0xa8] sm:$0xff]
    %v49 = vld [vmem:[#allocation2 + $0xb0] sm:$0xff]
    %v50 = vld [vmem:[#allocation2 + $0xb8] sm:$0xff]
    %v51 = vld [vmem:[#allocation2 + $0xc0] sm:$0xff]
    %v52 = vld [vmem:[#allocation2 + $0xc8] sm:$0xff]
    %v53 = vld [vmem:[#allocation2 + $0xd0] sm:$0x1]
    %v54 = vld [vmem:[#allocation2 + $0xd1] sm:$0x1]
    %v55 = vld [vmem:[#allocation2 + $0xd2] sm:$0x1]
    %v56 = vld [vmem:[#allocation2 + $0xd3] sm:$0x1]
    %v57 = vld [vmem:[#allocation2 + $0xd4] sm:$0x1]
    %v58 = vld [vmem:[#allocation2 + $0xd5] sm:$0x1]
    %v59 = vld [vmem:[#allocation2 + $0xd6] sm:$0x1]
    %v60 = vld [vmem:[#allocation2 + $0xd7] sm:$0x1]
    %v61 = vld [vmem:[#allocation2 + $0xd8] sm:$0x1]
    %vm62 = vcmask 261120
    %v63 = vsel %vm62, %v25, 0.0
    %64 = vadd.xlane.f32.xlu0 %v63
    %v65 = vpop.xlane.xlu0 %64
    %v66 = vsel %vm62, %v26, 0.0
    %67 = vadd.xlane.f32.xlu0 %v66
    %v68 = vpop.xlane.xlu0 %67
    %v69 = vrcp.pop 32.0
    %v70 = vmul.f32 %v65, %v69
    %v71 = vmul.f32 %v68, %v69
    %v72 = vsub.f32 %v25, %v70
    %v73 = vsub.f32 %v26, %v71
    %v74 = vmul.f32 %v72, %v72
    %v75 = vmul.f32 %v73, %v73
    %v76 = vsel %vm62, %v74, 0.0
    %77 = vadd.xlane.f32.xlu0 %v76
    %v78 = vpop.xlane.xlu0 %77
    %v79 = vsel %vm62, %v75, 0.0
    %80 = vadd.xlane.f32.xlu0 %v79
    %v81 = vpop.xlane.xlu0 %80
    %v82 = vmul.f32 %v78, %v69
    %v83 = vmul.f32 %v81, %v69
    %v84 = vadd.f32 %v82, 1e-06
    %v85 = vadd.f32 %v83, 1e-06
    %v86 = vrsqrt.pop %v84
    %v87 = vrsqrt.pop %v85
    %v88 = vmul.f32 %v72, %v86
    %v89 = vmul.f32 %v73, %v87
    %v90 = vlaneseq
    %v91 = vshrl.u32 %v90, 7
    %v92 = vsub.s32 0, %v91
    %v93 = vrot.slane %v53, %v92
    %v94 = vmul.f32 %v88, %v93
    %v95 = vmul.f32 %v89, %v93
    %v96 = vlaneseq
    %v97 = vshrl.u32 %v96, 7
    %v98 = vsub.s32 0, %v97
    %v99 = vrot.slane %v54, %v98
    %v100 = vadd.f32 %v94, %v99
    %v101 = vadd.f32 %v95, %v99
    %v102 = vlaneseq
    %v103 = vshrl.u32 %v102, 7
    %v104 = vsub.s32 0, %v103
    %v105 = vrot.slane %v57, %v104
    %v107 = vsel %vm62, %v100, 0
    %v110 = vsel %vm62, %v101, 0
    %112 = vmatprep.subr.mxu0 0.0
    %113 = vmatpush1.msra.mxu0 %v27
    %114 = vmatprep.subr.mxu0 0.0
    %115 = vmatpush1.msra.mxu0 %v28
    %116 = vmatprep.subr.mxu0 0.0
    %117 = vmatpush1.msra.mxu0 %v29
    %118 = vmatprep.subr.mxu0 0.0
    %119 = vmatpush1.msra.mxu0 %v30
    %120 = vmatprep.subr.mxu0 0.0
    %121 = vmatpush1.msra.mxu0 0.0
    %122 = vmatprep.subr.mxu0 0.0
    %123 = vmatpush1.msra.mxu0 0.0
    %124 = vmatprep.subr.mxu0 0.0
    %125 = vmatpush1.msra.mxu0 0.0
    %126 = vmatprep.subr.mxu0 0.0
    %127 = vmatpush1.msra.mxu0 0.0
    %128 = vmatprep.subr.mxu0 0.0
    %129 = vmatpush1.msra.mxu0 0.0
    %130 = vmatprep.subr.mxu0 0.0
    %131 = vmatpush1.msra.mxu0 0.0
    %132 = vmatprep.subr.mxu0 0.0
    %133 = vmatpush1.msra.mxu0 0.0
    %134 = vmatprep.subr.mxu0 0.0
    %135 = vmatpush1.msra.mxu0 0.0
    %136 = vmatprep.subr.mxu0 0.0
    %137 = vmatpush1.msra.mxu0 0.0
    %138 = vmatprep.subr.mxu0 0.0
    %139 = vmatpush1.msra.mxu0 0.0
    %140 = vmatprep.subr.mxu0 0.0
    %141 = vmatpush1.msra.mxu0 0.0
    %142 = vmatprep.subr.mxu0 0.0
    %143 = vmatpush1.msra.mxu0 0.0
    %144 = vmatprep.subr.mxu0 0.0
    %145 = vmatpush1.msra.mxu0 0.0
    %146 = vmatprep.subr.mxu0 0.0
    %147 = vmatpush1.msra.mxu0 0.0
    %148 = vmatprep.subr.mxu0 0.0
    %149 = vmatpush1.msra.mxu0 0.0
    %150 = vmatprep.subr.mxu0 0.0
    %151 = vmatpush1.msra.mxu0 0.0
    %152 = vmatprep.subr.mxu0 0.0
    %153 = vmatpush1.msra.mxu0 0.0
    %154 = vmatprep.subr.mxu0 0.0
    %155 = vmatpush1.msra.mxu0 0.0
    %156 = vmatprep.subr.mxu0 0.0
    %157 = vmatpush1.msra.mxu0 0.0
    %158 = vmatprep.subr.mxu0 0.0
    %159 = vmatpush1.msra.mxu0 0.0
    %160 = vmatprep.subr.mxu0 0.0
    %161 = vmatpush1.msra.mxu0 0.0
    %162 = vmatprep.subr.mxu0 0.0
    %163 = vmatpush1.msra.mxu0 0.0
    %164 = vmatprep.subr.mxu0 0.0
    %165 = vmatpush1.msra.mxu0 0.0
    %166 = vmatprep.subr.mxu0 0.0
    %167 = vmatpush1.msra.mxu0 0.0
    %168 = vmatprep.subr.mxu0 0.0
    %169 = vmatpush1.msra.mxu0 0.0
    %170 = vmatprep.subr.mxu0 0.0
    %171 = vmatpush1.msra.mxu0 0.0
    %172 = vmatprep.subr.mxu0 0.0
    %173 = vmatpush1.msra.mxu0 0.0
    %174 = vmatprep.subr.mxu0 0.0
    %175 = vmatpush1.msra.mxu0 0.0
    %176 = vmatprep.mubr.f32.mxu0 0.0
    %177 = vmatmul.mubr.f32.gmra.mrb[0].mxu0 %v107
    %v178 = vpop.f32.mrb[0].mxu0
    %v179 = vadd.f32 %v105, %v178
    %v180 = vpop.f32.mrb[0].mxu0
    %181 = vmatprep.mubr.f32.mxu0 0.0
    %182 = vmatmul.mubr.f32.gmra.mrb[0].mxu0 %v110
    %v183 = vpop.f32.mrb[0].mxu0
    %v184 = vadd.f32 %v105, %v183
    %v185 = vpop.f32.mrb[0].mxu0
    %186 = vdwg.mxu0
    %189 = vrot.lane.b32.xlu0 %v179, 96
    %v190 = vpop.permute.xlu0 %189
    %191 = vrot.lane.b32.xlu0 %v184, 96
    %v192 = vpop.permute.xlu0 %191
    %vm193 = vcmask 64512
    %v194 = vsel %vm193, %v179, 0
    %v196 = vsel %vm193, %v184, 0
    %v198 = vsel %vm193, %v190, 0
    %v200 = vsel %vm193, %v192, 0
    %202 = vmatprep.subr.mxu0 0.0
    %203 = vmatpush1.xpose.msra.mxu0 %v198
    %204 = vmatprep.subr.mxu0 0.0
    %205 = vmatpush1.xpose.msra.mxu0 %v200
    %206 = vmatprep.subr.mxu0 0.0
    %207 = vmatpush1.xpose.msra.mxu0 0.0
    %208 = vmatprep.subr.mxu0 0.0
    %209 = vmatpush1.xpose.msra.mxu0 0.0
    %210 = vmatprep.subr.mxu0 0.0
    %211 = vmatpush1.xpose.msra.mxu0 0.0
    %212 = vmatprep.subr.mxu0 0.0
    %213 = vmatpush1.xpose.msra.mxu0 0.0
    %214 = vmatprep.subr.mxu0 0.0
    %215 = vmatpush1.xpose.msra.mxu0 0.0
    %216 = vmatprep.subr.mxu0 0.0
    %217 = vmatpush1.xpose.msra.mxu0 0.0
    %218 = vmatprep.subr.mxu0 0.0
    %219 = vmatpush1.xpose.msra.mxu0 0.0
    %220 = vmatprep.subr.mxu0 0.0
    %221 = vmatpush1.xpose.msra.mxu0 0.0
    %222 = vmatprep.subr.mxu0 0.0
    %223 = vmatpush1.xpose.msra.mxu0 0.0
    %224 = vmatprep.subr.mxu0 0.0
    %225 = vmatpush1.xpose.msra.mxu0 0.0
    %226 = vmatprep.subr.mxu0 0.0
    %227 = vmatpush1.xpose.msra.mxu0 0.0
    %228 = vmatprep.subr.mxu0 0.0
    %229 = vmatpush1.xpose.msra.mxu0 0.0
    %230 = vmatprep.subr.mxu0 0.0
    %231 = vmatpush1.xpose.msra.mxu0 0.0
    %232 = vmatprep.subr.mxu0 0.0
    %233 = vmatpush1.xpose.msra.mxu0 0.0
    %234 = vmatprep.subr.mxu0 0.0
    %235 = vmatpush1.xpose.msra.mxu0 0.0
    %236 = vmatprep.subr.mxu0 0.0
    %237 = vmatpush1.xpose.msra.mxu0 0.0
    %238 = vmatprep.subr.mxu0 0.0
    %239 = vmatpush1.xpose.msra.mxu0 0.0
    %240 = vmatprep.subr.mxu0 0.0
    %241 = vmatpush1.xpose.msra.mxu0 0.0
    %242 = vmatprep.subr.mxu0 0.0
    %243 = vmatpush1.xpose.msra.mxu0 0.0
    %244 = vmatprep.subr.mxu0 0.0
    %245 = vmatpush1.xpose.msra.mxu0 0.0
    %246 = vmatprep.subr.mxu0 0.0
    %247 = vmatpush1.xpose.msra.mxu0 0.0
    %248 = vmatprep.subr.mxu0 0.0
    %249 = vmatpush1.xpose.msra.mxu0 0.0
    %250 = vmatprep.subr.mxu0 0.0
    %251 = vmatpush1.xpose.msra.mxu0 0.0
    %252 = vmatprep.subr.mxu0 0.0
    %253 = vmatpush1.xpose.msra.mxu0 0.0
    %254 = vmatprep.subr.mxu0 0.0
    %255 = vmatpush1.xpose.msra.mxu0 0.0
    %256 = vmatprep.subr.mxu0 0.0
    %257 = vmatpush1.xpose.msra.mxu0 0.0
    %258 = vmatprep.subr.mxu0 0.0
    %259 = vmatpush1.xpose.msra.mxu0 0.0
    %260 = vmatprep.subr.mxu0 0.0
    %261 = vmatpush1.xpose.msra.mxu0 0.0
    %262 = vmatprep.subr.mxu0 0.0
    %263 = vmatpush1.xpose.msra.mxu0 0.0
    %264 = vmatprep.subr.mxu0 0.0
    %265 = vmatpush1.xpose.msra.mxu0 0.0
    %266 = vmatprep.mubr.f32.mxu0 0.0
    %267 = vmatmul.mubr.f32.gmra.mrb[0].mxu0 %v194
    %v268 = vpop.f32.mrb[0].mxu0
    %v269 = vadd.f32 0.0, %v268
    %v270 = vpop.f32.mrb[0].mxu0
    %271 = vmatprep.mubr.f32.mxu0 0.0
    %272 = vmatmul.mubr.f32.gmra.mrb[0].mxu0 %v196
    %v273 = vpop.f32.mrb[0].mxu0
    %v274 = vadd.f32 0.0, %v273
    %v275 = vpop.f32.mrb[0].mxu0
    %276 = vdwg.mxu0
    %v277 = vmul.f32 %v269, 0.35355338
    %v278 = vmul.f32 %v274, 0.35355338
    %v279 = vadd.f32 %v277, %v51
    %v280 = vadd.f32 %v278, %v52
    %vm281 = vcmask 130048
    %v282 = vsel %vm281, %v279, -inf
    %283 = vmax.xlane.f32.xlu0 %v282
    %v284 = vpop.xlane.xlu0 %283
    %v285 = vsel %vm281, %v280, -inf
    %286 = vmax.xlane.f32.xlu0 %v285
    %v287 = vpop.xlane.xlu0 %286
    %v288 = vsub.f32 %v279, %v284
    %v289 = vsub.f32 %v280, %v287
    %v290 = vmul.f32 %v288, 1.442695
    %v291 = vpow.pop %v290
    %v292 = vmul.f32 %v289, 1.442695
    %v293 = vpow.pop %v292
    %v294 = vsel %vm281, %v291, 0.0
    %295 = vadd.xlane.f32.xlu0 %v294
    %v296 = vpop.xlane.xlu0 %295
    %v297 = vsel %vm281, %v293, 0.0
    %298 = vadd.xlane.f32.xlu0 %v297
    %v299 = vpop.xlane.xlu0 %298
    %v300 = vrcp.pop %v296
    %v301 = vmul.f32 %v291, %v300
    %v302 = vrcp.pop %v299
    %v303 = vmul.f32 %v293, %v302
    %304 = vrot.lane.b32.xlu0 %v179, 64
    %v305 = vpop.permute.xlu0 %304
    %306 = vrot.lane.b32.xlu0 %v184, 64
    %v307 = vpop.permute.xlu0 %306
    %v311 = vsel %vm281, %v301, 0
    %v314 = vsel %vm281, %v303, 0
    %316 = vmatprep.subr.mxu0 0.0
    %317 = vmatpush1.msra.mxu0 %v305
    %318 = vmatprep.subr.mxu0 0.0
    %319 = vmatpush1.msra.mxu0 %v307
    %320 = vmatprep.subr.mxu0 0.0
    %321 = vmatpush1.msra.mxu0 0.0
    %322 = vmatprep.subr.mxu0 0.0
    %323 = vmatpush1.msra.mxu0 0.0
    %324 = vmatprep.subr.mxu0 0.0
    %325 = vmatpush1.msra.mxu0 0.0
    %326 = vmatprep.subr.mxu0 0.0
    %327 = vmatpush1.msra.mxu0 0.0
    %328 = vmatprep.subr.mxu0 0.0
    %329 = vmatpush1.msra.mxu0 0.0
    %330 = vmatprep.subr.mxu0 0.0
    %331 = vmatpush1.msra.mxu0 0.0
    %332 = vmatprep.subr.mxu0 0.0
    %333 = vmatpush1.msra.mxu0 0.0
    %334 = vmatprep.subr.mxu0 0.0
    %335 = vmatpush1.msra.mxu0 0.0
    %336 = vmatprep.subr.mxu0 0.0
    %337 = vmatpush1.msra.mxu0 0.0
    %338 = vmatprep.subr.mxu0 0.0
    %339 = vmatpush1.msra.mxu0 0.0
    %340 = vmatprep.subr.mxu0 0.0
    %341 = vmatpush1.msra.mxu0 0.0
    %342 = vmatprep.subr.mxu0 0.0
    %343 = vmatpush1.msra.mxu0 0.0
    %344 = vmatprep.subr.mxu0 0.0
    %345 = vmatpush1.msra.mxu0 0.0
    %346 = vmatprep.subr.mxu0 0.0
    %347 = vmatpush1.msra.mxu0 0.0
    %348 = vmatprep.subr.mxu0 0.0
    %349 = vmatpush1.msra.mxu0 0.0
    %350 = vmatprep.subr.mxu0 0.0
    %351 = vmatpush1.msra.mxu0 0.0
    %352 = vmatprep.subr.mxu0 0.0
    %353 = vmatpush1.msra.mxu0 0.0
    %354 = vmatprep.subr.mxu0 0.0
    %355 = vmatpush1.msra.mxu0 0.0
    %356 = vmatprep.subr.mxu0 0.0
    %357 = vmatpush1.msra.mxu0 0.0
    %358 = vmatprep.subr.mxu0 0.0
    %359 = vmatpush1.msra.mxu0 0.0
    %360 = vmatprep.subr.mxu0 0.0
    %361 = vmatpush1.msra.mxu0 0.0
    %362 = vmatprep.subr.mxu0 0.0
    %363 = vmatpush1.msra.mxu0 0.0
    %364 = vmatprep.subr.mxu0 0.0
    %365 = vmatpush1.msra.mxu0 0.0
    %366 = vmatprep.subr.mxu0 0.0
    %367 = vmatpush1.msra.mxu0 0.0
    %368 = vmatprep.subr.mxu0 0.0
    %369 = vmatpush1.msra.mxu0 0.0
    %370 = vmatprep.subr.mxu0 0.0
    %371 = vmatpush1.msra.mxu0 0.0
    %372 = vmatprep.subr.mxu0 0.0
    %373 = vmatpush1.msra.mxu0 0.0
    %374 = vmatprep.subr.mxu0 0.0
    %375 = vmatpush1.msra.mxu0 0.0
    %376 = vmatprep.subr.mxu0 0.0
    %377 = vmatpush1.msra.mxu0 0.0
    %378 = vmatprep.subr.mxu0 0.0
    %379 = vmatpush1.msra.mxu0 0.0
    %380 = vmatprep.mubr.f32.mxu0 0.0
    %381 = vmatmul.mubr.f32.gmra.mrb[0].mxu0 %v311
    %v382 = vpop.f32.mrb[0].mxu0
    %v383 = vadd.f32 0.0, %v382
    %v384 = vpop.f32.mrb[0].mxu0
    %385 = vmatprep.mubr.f32.mxu0 0.0
    %386 = vmatmul.mubr.f32.gmra.mrb[0].mxu0 %v314
    %v387 = vpop.f32.mrb[0].mxu0
    %v388 = vadd.f32 0.0, %v387
    %v389 = vpop.f32.mrb[0].mxu0
    %390 = vdwg.mxu0
    %391 = vrot.lane.b32.xlu0 %v179, 120
    %v392 = vpop.permute.xlu0 %391
    %393 = vrot.lane.b32.xlu0 %v184, 120
    %v394 = vpop.permute.xlu0 %393
    %395 = vrot.lane.b32.xlu0 %v179, 88
    %v396 = vpop.permute.xlu0 %395
    %397 = vrot.lane.b32.xlu0 %v184, 88
    %v398 = vpop.permute.xlu0 %397
    %v399 = vsel %vm193, %v392, 0
    %v401 = vsel %vm193, %v394, 0
    %v403 = vsel %vm193, %v396, 0
    %v405 = vsel %vm193, %v398, 0
    %407 = vmatprep.subr.mxu0 0.0
    %408 = vmatpush1.xpose.msra.mxu0 %v403
    %409 = vmatprep.subr.mxu0 0.0
    %410 = vmatpush1.xpose.msra.mxu0 %v405
    %411 = vmatprep.subr.mxu0 0.0
    %412 = vmatpush1.xpose.msra.mxu0 0.0
    %413 = vmatprep.subr.mxu0 0.0
    %414 = vmatpush1.xpose.msra.mxu0 0.0
    %415 = vmatprep.subr.mxu0 0.0
    %416 = vmatpush1.xpose.msra.mxu0 0.0
    %417 = vmatprep.subr.mxu0 0.0
    %418 = vmatpush1.xpose.msra.mxu0 0.0
    %419 = vmatprep.subr.mxu0 0.0
    %420 = vmatpush1.xpose.msra.mxu0 0.0
    %421 = vmatprep.subr.mxu0 0.0
    %422 = vmatpush1.xpose.msra.mxu0 0.0
    %423 = vmatprep.subr.mxu0 0.0
    %424 = vmatpush1.xpose.msra.mxu0 0.0
    %425 = vmatprep.subr.mxu0 0.0
    %426 = vmatpush1.xpose.msra.mxu0 0.0
    %427 = vmatprep.subr.mxu0 0.0
    %428 = vmatpush1.xpose.msra.mxu0 0.0
    %429 = vmatprep.subr.mxu0 0.0
    %430 = vmatpush1.xpose.msra.mxu0 0.0
    %431 = vmatprep.subr.mxu0 0.0
    %432 = vmatpush1.xpose.msra.mxu0 0.0
    %433 = vmatprep.subr.mxu0 0.0
    %434 = vmatpush1.xpose.msra.mxu0 0.0
    %435 = vmatprep.subr.mxu0 0.0
    %436 = vmatpush1.xpose.msra.mxu0 0.0
    %437 = vmatprep.subr.mxu0 0.0
    %438 = vmatpush1.xpose.msra.mxu0 0.0
    %439 = vmatprep.subr.mxu0 0.0
    %440 = vmatpush1.xpose.msra.mxu0 0.0
    %441 = vmatprep.subr.mxu0 0.0
    %442 = vmatpush1.xpose.msra.mxu0 0.0
    %443 = vmatprep.subr.mxu0 0.0
    %444 = vmatpush1.xpose.msra.mxu0 0.0
    %445 = vmatprep.subr.mxu0 0.0
    %446 = vmatpush1.xpose.msra.mxu0 0.0
    %447 = vmatprep.subr.mxu0 0.0
    %448 = vmatpush1.xpose.msra.mxu0 0.0
    %449 = vmatprep.subr.mxu0 0.0
    %450 = vmatpush1.xpose.msra.mxu0 0.0
    %451 = vmatprep.subr.mxu0 0.0
    %452 = vmatpush1.xpose.msra.mxu0 0.0
    %453 = vmatprep.subr.mxu0 0.0
    %454 = vmatpush1.xpose.msra.mxu0 0.0
    %455 = vmatprep.subr.mxu0 0.0
    %456 = vmatpush1.xpose.msra.mxu0 0.0
    %457 = vmatprep.subr.mxu0 0.0
    %458 = vmatpush1.xpose.msra.mxu0 0.0
    %459 = vmatprep.subr.mxu0 0.0
    %460 = vmatpush1.xpose.msra.mxu0 0.0
    %461 = vmatprep.subr.mxu0 0.0
    %462 = vmatpush1.xpose.msra.mxu0 0.0
    %463 = vmatprep.subr.mxu0 0.0
    %464 = vmatpush1.xpose.msra.mxu0 0.0
    %465 = vmatprep.subr.mxu0 0.0
    %466 = vmatpush1.xpose.msra.mxu0 0.0
    %467 = vmatprep.subr.mxu0 0.0
    %468 = vmatpush1.xpose.msra.mxu0 0.0
    %469 = vmatprep.subr.mxu0 0.0
    %470 = vmatpush1.xpose.msra.mxu0 0.0
    %471 = vmatprep.mubr.f32.mxu0 0.0
    %472 = vmatmul.mubr.f32.gmra.mrb[0].mxu0 %v399
    %v473 = vpop.f32.mrb[0].mxu0
    %v474 = vadd.f32 0.0, %v473
    %v475 = vpop.f32.mrb[0].mxu0
    %476 = vmatprep.mubr.f32.mxu0 0.0
    %477 = vmatmul.mubr.f32.gmra.mrb[0].mxu0 %v401
    %v478 = vpop.f32.mrb[0].mxu0
    %v479 = vadd.f32 0.0, %v478
    %v480 = vpop.f32.mrb[0].mxu0
    %481 = vdwg.mxu0
    %v482 = vmul.f32 %v474, 0.35355338
    %v483 = vmul.f32 %v479, 0.35355338
    %v484 = vadd.f32 %v482, %v51
    %v485 = vadd.f32 %v483, %v52
    %v486 = vsel %vm281, %v484, -inf
    %487 = vmax.xlane.f32.xlu0 %v486
    %v488 = vpop.xlane.xlu0 %487
    %v489 = vsel %vm281, %v485, -inf
    %490 = vmax.xlane.f32.xlu0 %v489
    %v491 = vpop.xlane.xlu0 %490
    %v492 = vsub.f32 %v484, %v488
    %v493 = vsub.f32 %v485, %v491
    %v494 = vmul.f32 %v492, 1.442695
    %v495 = vpow.pop %v494
    %v496 = vmul.f32 %v493, 1.442695
    %v497 = vpow.pop %v496
    %v498 = vsel %vm281, %v495, 0.0
    %499 = vadd.xlane.f32.xlu0 %v498
    %v500 = vpop.xlane.xlu0 %499
    %v501 = vsel %vm281, %v497, 0.0
    %502 = vadd.xlane.f32.xlu0 %v501
    %v503 = vpop.xlane.xlu0 %502
    %v504 = vrcp.pop %v500
    %v505 = vmul.f32 %v495, %v504
    %v506 = vrcp.pop %v503
    %v507 = vmul.f32 %v497, %v506
    %508 = vrot.lane.b32.xlu0 %v179, 56
    %v509 = vpop.permute.xlu0 %508
    %510 = vrot.lane.b32.xlu0 %v184, 56
    %v511 = vpop.permute.xlu0 %510
    %v515 = vsel %vm281, %v505, 0
    %v518 = vsel %vm281, %v507, 0
    %520 = vmatprep.subr.mxu0 0.0
    %521 = vmatpush1.msra.mxu0 %v509
    %522 = vmatprep.subr.mxu0 0.0
    %523 = vmatpush1.msra.mxu0 %v511
    %524 = vmatprep.subr.mxu0 0.0
    %525 = vmatpush1.msra.mxu0 0.0
    %526 = vmatprep.subr.mxu0 0.0
    %527 = vmatpush1.msra.mxu0 0.0
    %528 = vmatprep.subr.mxu0 0.0
    %529 = vmatpush1.msra.mxu0 0.0
    %530 = vmatprep.subr.mxu0 0.0
    %531 = vmatpush1.msra.mxu0 0.0
    %532 = vmatprep.subr.mxu0 0.0
    %533 = vmatpush1.msra.mxu0 0.0
    %534 = vmatprep.subr.mxu0 0.0
    %535 = vmatpush1.msra.mxu0 0.0
    %536 = vmatprep.subr.mxu0 0.0
    %537 = vmatpush1.msra.mxu0 0.0
    %538 = vmatprep.subr.mxu0 0.0
    %539 = vmatpush1.msra.mxu0 0.0
    %540 = vmatprep.subr.mxu0 0.0
    %541 = vmatpush1.msra.mxu0 0.0
    %542 = vmatprep.subr.mxu0 0.0
    %543 = vmatpush1.msra.mxu0 0.0
    %544 = vmatprep.subr.mxu0 0.0
    %545 = vmatpush1.msra.mxu0 0.0
    %546 = vmatprep.subr.mxu0 0.0
    %547 = vmatpush1.msra.mxu0 0.0
    %548 = vmatprep.subr.mxu0 0.0
    %549 = vmatpush1.msra.mxu0 0.0
    %550 = vmatprep.subr.mxu0 0.0
    %551 = vmatpush1.msra.mxu0 0.0
    %552 = vmatprep.subr.mxu0 0.0
    %553 = vmatpush1.msra.mxu0 0.0
    %554 = vmatprep.subr.mxu0 0.0
    %555 = vmatpush1.msra.mxu0 0.0
    %556 = vmatprep.subr.mxu0 0.0
    %557 = vmatpush1.msra.mxu0 0.0
    %558 = vmatprep.subr.mxu0 0.0
    %559 = vmatpush1.msra.mxu0 0.0
    %560 = vmatprep.subr.mxu0 0.0
    %561 = vmatpush1.msra.mxu0 0.0
    %562 = vmatprep.subr.mxu0 0.0
    %563 = vmatpush1.msra.mxu0 0.0
    %564 = vmatprep.subr.mxu0 0.0
    %565 = vmatpush1.msra.mxu0 0.0
    %566 = vmatprep.subr.mxu0 0.0
    %567 = vmatpush1.msra.mxu0 0.0
    %568 = vmatprep.subr.mxu0 0.0
    %569 = vmatpush1.msra.mxu0 0.0
    %570 = vmatprep.subr.mxu0 0.0
    %571 = vmatpush1.msra.mxu0 0.0
    %572 = vmatprep.subr.mxu0 0.0
    %573 = vmatpush1.msra.mxu0 0.0
    %574 = vmatprep.subr.mxu0 0.0
    %575 = vmatpush1.msra.mxu0 0.0
    %576 = vmatprep.subr.mxu0 0.0
    %577 = vmatpush1.msra.mxu0 0.0
    %578 = vmatprep.subr.mxu0 0.0
    %579 = vmatpush1.msra.mxu0 0.0
    %580 = vmatprep.subr.mxu0 0.0
    %581 = vmatpush1.msra.mxu0 0.0
    %582 = vmatprep.subr.mxu0 0.0
    %583 = vmatpush1.msra.mxu0 0.0
    %584 = vmatprep.mubr.f32.mxu0 0.0
    %585 = vmatmul.mubr.f32.gmra.mrb[0].mxu0 %v515
    %v586 = vpop.f32.mrb[0].mxu0
    %v587 = vadd.f32 0.0, %v586
    %v588 = vpop.f32.mrb[0].mxu0
    %589 = vmatprep.mubr.f32.mxu0 0.0
    %590 = vmatmul.mubr.f32.gmra.mrb[0].mxu0 %v518
    %v591 = vpop.f32.mrb[0].mxu0
    %v592 = vadd.f32 0.0, %v591
    %v593 = vpop.f32.mrb[0].mxu0
    %594 = vdwg.mxu0
    %595 = vrot.lane.b32.xlu0 %v179, 112
    %v596 = vpop.permute.xlu0 %595
    %597 = vrot.lane.b32.xlu0 %v184, 112
    %v598 = vpop.permute.xlu0 %597
    %599 = vrot.lane.b32.xlu0 %v179, 80
    %v600 = vpop.permute.xlu0 %599
    %601 = vrot.lane.b32.xlu0 %v184, 80
    %v602 = vpop.permute.xlu0 %601
    %v603 = vsel %vm193, %v596, 0
    %v605 = vsel %vm193, %v598, 0
    %v607 = vsel %vm193, %v600, 0
    %v609 = vsel %vm193, %v602, 0
    %611 = vmatprep.subr.mxu0 0.0
    %612 = vmatpush1.xpose.msra.mxu0 %v607
    %613 = vmatprep.subr.mxu0 0.0
    %614 = vmatpush1.xpose.msra.mxu0 %v609
    %615 = vmatprep.subr.mxu0 0.0
    %616 = vmatpush1.xpose.msra.mxu0 0.0
    %617 = vmatprep.subr.mxu0 0.0
    %618 = vmatpush1.xpose.msra.mxu0 0.0
    %619 = vmatprep.subr.mxu0 0.0
    %620 = vmatpush1.xpose.msra.mxu0 0.0
    %621 = vmatprep.subr.mxu0 0.0
    %622 = vmatpush1.xpose.msra.mxu0 0.0
    %623 = vmatprep.subr.mxu0 0.0
    %624 = vmatpush1.xpose.msra.mxu0 0.0
    %625 = vmatprep.subr.mxu0 0.0
    %626 = vmatpush1.xpose.msra.mxu0 0.0
    %627 = vmatprep.subr.mxu0 0.0
    %628 = vmatpush1.xpose.msra.mxu0 0.0
    %629 = vmatprep.subr.mxu0 0.0
    %630 = vmatpush1.xpose.msra.mxu0 0.0
    %631 = vmatprep.subr.mxu0 0.0
    %632 = vmatpush1.xpose.msra.mxu0 0.0
    %633 = vmatprep.subr.mxu0 0.0
    %634 = vmatpush1.xpose.msra.mxu0 0.0
    %635 = vmatprep.subr.mxu0 0.0
    %636 = vmatpush1.xpose.msra.mxu0 0.0
    %637 = vmatprep.subr.mxu0 0.0
    %638 = vmatpush1.xpose.msra.mxu0 0.0
    %639 = vmatprep.subr.mxu0 0.0
    %640 = vmatpush1.xpose.msra.mxu0 0.0
    %641 = vmatprep.subr.mxu0 0.0
    %642 = vmatpush1.xpose.msra.mxu0 0.0
    %643 = vmatprep.subr.mxu0 0.0
    %644 = vmatpush1.xpose.msra.mxu0 0.0
    %645 = vmatprep.subr.mxu0 0.0
    %646 = vmatpush1.xpose.msra.mxu0 0.0
    %647 = vmatprep.subr.mxu0 0.0
    %648 = vmatpush1.xpose.msra.mxu0 0.0
    %649 = vmatprep.subr.mxu0 0.0
    %650 = vmatpush1.xpose.msra.mxu0 0.0
    %651 = vmatprep.subr.mxu0 0.0
    %652 = vmatpush1.xpose.msra.mxu0 0.0
    %653 = vmatprep.subr.mxu0 0.0
    %654 = vmatpush1.xpose.msra.mxu0 0.0
    %655 = vmatprep.subr.mxu0 0.0
    %656 = vmatpush1.xpose.msra.mxu0 0.0
    %657 = vmatprep.subr.mxu0 0.0
    %658 = vmatpush1.xpose.msra.mxu0 0.0
    %659 = vmatprep.subr.mxu0 0.0
    %660 = vmatpush1.xpose.msra.mxu0 0.0
    %661 = vmatprep.subr.mxu0 0.0
    %662 = vmatpush1.xpose.msra.mxu0 0.0
    %663 = vmatprep.subr.mxu0 0.0
    %664 = vmatpush1.xpose.msra.mxu0 0.0
    %665 = vmatprep.subr.mxu0 0.0
    %666 = vmatpush1.xpose.msra.mxu0 0.0
    %667 = vmatprep.subr.mxu0 0.0
    %668 = vmatpush1.xpose.msra.mxu0 0.0
    %669 = vmatprep.subr.mxu0 0.0
    %670 = vmatpush1.xpose.msra.mxu0 0.0
    %671 = vmatprep.subr.mxu0 0.0
    %672 = vmatpush1.xpose.msra.mxu0 0.0
    %673 = vmatprep.subr.mxu0 0.0
    %674 = vmatpush1.xpose.msra.mxu0 0.0
    %675 = vmatprep.mubr.f32.mxu0 0.0
    %676 = vmatmul.mubr.f32.gmra.mrb[0].mxu0 %v603
    %v677 = vpop.f32.mrb[0].mxu0
    %v678 = vadd.f32 0.0, %v677
    %v679 = vpop.f32.mrb[0].mxu0
    %680 = vmatprep.mubr.f32.mxu0 0.0
    %681 = vmatmul.mubr.f32.gmra.mrb[0].mxu0 %v605
    %v682 = vpop.f32.mrb[0].mxu0
    %v683 = vadd.f32 0.0, %v682
    %v684 = vpop.f32.mrb[0].mxu0
    %685 = vdwg.mxu0
    %v686 = vmul.f32 %v678, 0.35355338
    %v687 = vmul.f32 %v683, 0.35355338
    %v688 = vadd.f32 %v686, %v51
    %v689 = vadd.f32 %v687, %v52
    %v690 = vsel %vm281, %v688, -inf
    %691 = vmax.xlane.f32.xlu0 %v690
    %v692 = vpop.xlane.xlu0 %691
    %v693 = vsel %vm281, %v689, -inf
    %694 = vmax.xlane.f32.xlu0 %v693
    %v695 = vpop.xlane.xlu0 %694
    %v696 = vsub.f32 %v688, %v692
    %v697 = vsub.f32 %v689, %v695
    %v698 = vmul.f32 %v696, 1.442695
    %v699 = vpow.pop %v698
    %v700 = vmul.f32 %v697, 1.442695
    %v701 = vpow.pop %v700
    %v702 = vsel %vm281, %v699, 0.0
    %703 = vadd.xlane.f32.xlu0 %v702
    %v704 = vpop.xlane.xlu0 %703
    %v705 = vsel %vm281, %v701, 0.0
    %706 = vadd.xlane.f32.xlu0 %v705
    %v707 = vpop.xlane.xlu0 %706
    %v708 = vrcp.pop %v704
    %v709 = vmul.f32 %v699, %v708
    %v710 = vrcp.pop %v707
    %v711 = vmul.f32 %v701, %v710
    %712 = vrot.lane.b32.xlu0 %v179, 48
    %v713 = vpop.permute.xlu0 %712
    %714 = vrot.lane.b32.xlu0 %v184, 48
    %v715 = vpop.permute.xlu0 %714
    %v719 = vsel %vm281, %v709, 0
    %v722 = vsel %vm281, %v711, 0
    %724 = vmatprep.subr.mxu0 0.0
    %725 = vmatpush1.msra.mxu0 %v713
    %726 = vmatprep.subr.mxu0 0.0
    %727 = vmatpush1.msra.mxu0 %v715
    %728 = vmatprep.subr.mxu0 0.0
    %729 = vmatpush1.msra.mxu0 0.0
    %730 = vmatprep.subr.mxu0 0.0
    %731 = vmatpush1.msra.mxu0 0.0
    %732 = vmatprep.subr.mxu0 0.0
    %733 = vmatpush1.msra.mxu0 0.0
    %734 = vmatprep.subr.mxu0 0.0
    %735 = vmatpush1.msra.mxu0 0.0
    %736 = vmatprep.subr.mxu0 0.0
    %737 = vmatpush1.msra.mxu0 0.0
    %738 = vmatprep.subr.mxu0 0.0
    %739 = vmatpush1.msra.mxu0 0.0
    %740 = vmatprep.subr.mxu0 0.0
    %741 = vmatpush1.msra.mxu0 0.0
    %742 = vmatprep.subr.mxu0 0.0
    %743 = vmatpush1.msra.mxu0 0.0
    %744 = vmatprep.subr.mxu0 0.0
    %745 = vmatpush1.msra.mxu0 0.0
    %746 = vmatprep.subr.mxu0 0.0
    %747 = vmatpush1.msra.mxu0 0.0
    %748 = vmatprep.subr.mxu0 0.0
    %749 = vmatpush1.msra.mxu0 0.0
    %750 = vmatprep.subr.mxu0 0.0
    %751 = vmatpush1.msra.mxu0 0.0
    %752 = vmatprep.subr.mxu0 0.0
    %753 = vmatpush1.msra.mxu0 0.0
    %754 = vmatprep.subr.mxu0 0.0
    %755 = vmatpush1.msra.mxu0 0.0
    %756 = vmatprep.subr.mxu0 0.0
    %757 = vmatpush1.msra.mxu0 0.0
    %758 = vmatprep.subr.mxu0 0.0
    %759 = vmatpush1.msra.mxu0 0.0
    %760 = vmatprep.subr.mxu0 0.0
    %761 = vmatpush1.msra.mxu0 0.0
    %762 = vmatprep.subr.mxu0 0.0
    %763 = vmatpush1.msra.mxu0 0.0
    %764 = vmatprep.subr.mxu0 0.0
    %765 = vmatpush1.msra.mxu0 0.0
    %766 = vmatprep.subr.mxu0 0.0
    %767 = vmatpush1.msra.mxu0 0.0
    %768 = vmatprep.subr.mxu0 0.0
    %769 = vmatpush1.msra.mxu0 0.0
    %770 = vmatprep.subr.mxu0 0.0
    %771 = vmatpush1.msra.mxu0 0.0
    %772 = vmatprep.subr.mxu0 0.0
    %773 = vmatpush1.msra.mxu0 0.0
    %774 = vmatprep.subr.mxu0 0.0
    %775 = vmatpush1.msra.mxu0 0.0
    %776 = vmatprep.subr.mxu0 0.0
    %777 = vmatpush1.msra.mxu0 0.0
    %778 = vmatprep.subr.mxu0 0.0
    %779 = vmatpush1.msra.mxu0 0.0
    %780 = vmatprep.subr.mxu0 0.0
    %781 = vmatpush1.msra.mxu0 0.0
    %782 = vmatprep.subr.mxu0 0.0
    %783 = vmatpush1.msra.mxu0 0.0
    %784 = vmatprep.subr.mxu0 0.0
    %785 = vmatpush1.msra.mxu0 0.0
    %786 = vmatprep.subr.mxu0 0.0
    %787 = vmatpush1.msra.mxu0 0.0
    %788 = vmatprep.mubr.f32.mxu0 0.0
    %789 = vmatmul.mubr.f32.gmra.mrb[0].mxu0 %v719
    %v790 = vpop.f32.mrb[0].mxu0
    %v791 = vadd.f32 0.0, %v790
    %v792 = vpop.f32.mrb[0].mxu0
    %793 = vmatprep.mubr.f32.mxu0 0.0
    %794 = vmatmul.mubr.f32.gmra.mrb[0].mxu0 %v722
    %v795 = vpop.f32.mrb[0].mxu0
    %v796 = vadd.f32 0.0, %v795
    %v797 = vpop.f32.mrb[0].mxu0
    %798 = vdwg.mxu0
    %799 = vrot.lane.b32.xlu0 %v179, 104
    %v800 = vpop.permute.xlu0 %799
    %801 = vrot.lane.b32.xlu0 %v184, 104
    %v802 = vpop.permute.xlu0 %801
    %803 = vrot.lane.b32.xlu0 %v179, 72
    %v804 = vpop.permute.xlu0 %803
    %805 = vrot.lane.b32.xlu0 %v184, 72
    %v806 = vpop.permute.xlu0 %805
    %v807 = vsel %vm193, %v800, 0
    %v809 = vsel %vm193, %v802, 0
    %v811 = vsel %vm193, %v804, 0
    %v813 = vsel %vm193, %v806, 0
    %815 = vmatprep.subr.mxu0 0.0
    %816 = vmatpush1.xpose.msra.mxu0 %v811
    %817 = vmatprep.subr.mxu0 0.0
    %818 = vmatpush1.xpose.msra.mxu0 %v813
    %819 = vmatprep.subr.mxu0 0.0
    %820 = vmatpush1.xpose.msra.mxu0 0.0
    %821 = vmatprep.subr.mxu0 0.0
    %822 = vmatpush1.xpose.msra.mxu0 0.0
    %823 = vmatprep.subr.mxu0 0.0
    %824 = vmatpush1.xpose.msra.mxu0 0.0
    %825 = vmatprep.subr.mxu0 0.0
    %826 = vmatpush1.xpose.msra.mxu0 0.0
    %827 = vmatprep.subr.mxu0 0.0
    %828 = vmatpush1.xpose.msra.mxu0 0.0
    %829 = vmatprep.subr.mxu0 0.0
    %830 = vmatpush1.xpose.msra.mxu0 0.0
    %831 = vmatprep.subr.mxu0 0.0
    %832 = vmatpush1.xpose.msra.mxu0 0.0
    %833 = vmatprep.subr.mxu0 0.0
    %834 = vmatpush1.xpose.msra.mxu0 0.0
    %835 = vmatprep.subr.mxu0 0.0
    %836 = vmatpush1.xpose.msra.mxu0 0.0
    %837 = vmatprep.subr.mxu0 0.0
    %838 = vmatpush1.xpose.msra.mxu0 0.0
    %839 = vmatprep.subr.mxu0 0.0
    %840 = vmatpush1.xpose.msra.mxu0 0.0
    %841 = vmatprep.subr.mxu0 0.0
    %842 = vmatpush1.xpose.msra.mxu0 0.0
    %843 = vmatprep.subr.mxu0 0.0
    %844 = vmatpush1.xpose.msra.mxu0 0.0
    %845 = vmatprep.subr.mxu0 0.0
    %846 = vmatpush1.xpose.msra.mxu0 0.0
    %847 = vmatprep.subr.mxu0 0.0
    %848 = vmatpush1.xpose.msra.mxu0 0.0
    %849 = vmatprep.subr.mxu0 0.0
    %850 = vmatpush1.xpose.msra.mxu0 0.0
    %851 = vmatprep.subr.mxu0 0.0
    %852 = vmatpush1.xpose.msra.mxu0 0.0
    %853 = vmatprep.subr.mxu0 0.0
    %854 = vmatpush1.xpose.msra.mxu0 0.0
    %855 = vmatprep.subr.mxu0 0.0
    %856 = vmatpush1.xpose.msra.mxu0 0.0
    %857 = vmatprep.subr.mxu0 0.0
    %858 = vmatpush1.xpose.msra.mxu0 0.0
    %859 = vmatprep.subr.mxu0 0.0
    %860 = vmatpush1.xpose.msra.mxu0 0.0
    %861 = vmatprep.subr.mxu0 0.0
    %862 = vmatpush1.xpose.msra.mxu0 0.0
    %863 = vmatprep.subr.mxu0 0.0
    %864 = vmatpush1.xpose.msra.mxu0 0.0
    %865 = vmatprep.subr.mxu0 0.0
    %866 = vmatpush1.xpose.msra.mxu0 0.0
    %867 = vmatprep.subr.mxu0 0.0
    %868 = vmatpush1.xpose.msra.mxu0 0.0
    %869 = vmatprep.subr.mxu0 0.0
    %870 = vmatpush1.xpose.msra.mxu0 0.0
    %871 = vmatprep.subr.mxu0 0.0
    %872 = vmatpush1.xpose.msra.mxu0 0.0
    %873 = vmatprep.subr.mxu0 0.0
    %874 = vmatpush1.xpose.msra.mxu0 0.0
    %875 = vmatprep.subr.mxu0 0.0
    %876 = vmatpush1.xpose.msra.mxu0 0.0
    %877 = vmatprep.subr.mxu0 0.0
    %878 = vmatpush1.xpose.msra.mxu0 0.0
    %879 = vmatprep.mubr.f32.mxu0 0.0
    %880 = vmatmul.mubr.f32.gmra.mrb[0].mxu0 %v807
    %v881 = vpop.f32.mrb[0].mxu0
    %v882 = vadd.f32 0.0, %v881
    %v883 = vpop.f32.mrb[0].mxu0
    %884 = vmatprep.mubr.f32.mxu0 0.0
    %885 = vmatmul.mubr.f32.gmra.mrb[0].mxu0 %v809
    %v886 = vpop.f32.mrb[0].mxu0
    %v887 = vadd.f32 0.0, %v886
    %v888 = vpop.f32.mrb[0].mxu0
    %889 = vdwg.mxu0
    %v890 = vmul.f32 %v882, 0.35355338
    %v891 = vmul.f32 %v887, 0.35355338
    %v892 = vadd.f32 %v890, %v51
    %v893 = vadd.f32 %v891, %v52
    %v894 = vsel %vm281, %v892, -inf
    %895 = vmax.xlane.f32.xlu0 %v894
    %v896 = vpop.xlane.xlu0 %895
    %v897 = vsel %vm281, %v893, -inf
    %898 = vmax.xlane.f32.xlu0 %v897
    %v899 = vpop.xlane.xlu0 %898
    %v900 = vsub.f32 %v892, %v896
    %v901 = vsub.f32 %v893, %v899
    %v902 = vmul.f32 %v900, 1.442695
    %v903 = vpow.pop %v902
    %v904 = vmul.f32 %v901, 1.442695
    %v905 = vpow.pop %v904
    %v906 = vsel %vm281, %v903, 0.0
    %907 = vadd.xlane.f32.xlu0 %v906
    %v908 = vpop.xlane.xlu0 %907
    %v909 = vsel %vm281, %v905, 0.0
    %910 = vadd.xlane.f32.xlu0 %v909
    %v911 = vpop.xlane.xlu0 %910
    %v912 = vrcp.pop %v908
    %v913 = vmul.f32 %v903, %v912
    %v914 = vrcp.pop %v911
    %v915 = vmul.f32 %v905, %v914
    %916 = vrot.lane.b32.xlu0 %v179, 40
    %v917 = vpop.permute.xlu0 %916
    %918 = vrot.lane.b32.xlu0 %v184, 40
    %v919 = vpop.permute.xlu0 %918
    %v923 = vsel %vm281, %v913, 0
    %v926 = vsel %vm281, %v915, 0
    %928 = vmatprep.subr.mxu0 0.0
    %929 = vmatpush1.msra.mxu0 %v917
    %930 = vmatprep.subr.mxu0 0.0
    %931 = vmatpush1.msra.mxu0 %v919
    %932 = vmatprep.subr.mxu0 0.0
    %933 = vmatpush1.msra.mxu0 0.0
    %934 = vmatprep.subr.mxu0 0.0
    %935 = vmatpush1.msra.mxu0 0.0
    %936 = vmatprep.subr.mxu0 0.0
    %937 = vmatpush1.msra.mxu0 0.0
    %938 = vmatprep.subr.mxu0 0.0
    %939 = vmatpush1.msra.mxu0 0.0
    %940 = vmatprep.subr.mxu0 0.0
    %941 = vmatpush1.msra.mxu0 0.0
    %942 = vmatprep.subr.mxu0 0.0
    %943 = vmatpush1.msra.mxu0 0.0
    %944 = vmatprep.subr.mxu0 0.0
    %945 = vmatpush1.msra.mxu0 0.0
    %946 = vmatprep.subr.mxu0 0.0
    %947 = vmatpush1.msra.mxu0 0.0
    %948 = vmatprep.subr.mxu0 0.0
    %949 = vmatpush1.msra.mxu0 0.0
    %950 = vmatprep.subr.mxu0 0.0
    %951 = vmatpush1.msra.mxu0 0.0
    %952 = vmatprep.subr.mxu0 0.0
    %953 = vmatpush1.msra.mxu0 0.0
    %954 = vmatprep.subr.mxu0 0.0
    %955 = vmatpush1.msra.mxu0 0.0
    %956 = vmatprep.subr.mxu0 0.0
    %957 = vmatpush1.msra.mxu0 0.0
    %958 = vmatprep.subr.mxu0 0.0
    %959 = vmatpush1.msra.mxu0 0.0
    %960 = vmatprep.subr.mxu0 0.0
    %961 = vmatpush1.msra.mxu0 0.0
    %962 = vmatprep.subr.mxu0 0.0
    %963 = vmatpush1.msra.mxu0 0.0
    %964 = vmatprep.subr.mxu0 0.0
    %965 = vmatpush1.msra.mxu0 0.0
    %966 = vmatprep.subr.mxu0 0.0
    %967 = vmatpush1.msra.mxu0 0.0
    %968 = vmatprep.subr.mxu0 0.0
    %969 = vmatpush1.msra.mxu0 0.0
    %970 = vmatprep.subr.mxu0 0.0
    %971 = vmatpush1.msra.mxu0 0.0
    %972 = vmatprep.subr.mxu0 0.0
    %973 = vmatpush1.msra.mxu0 0.0
    %974 = vmatprep.subr.mxu0 0.0
    %975 = vmatpush1.msra.mxu0 0.0
    %976 = vmatprep.subr.mxu0 0.0
    %977 = vmatpush1.msra.mxu0 0.0
    %978 = vmatprep.subr.mxu0 0.0
    %979 = vmatpush1.msra.mxu0 0.0
    %980 = vmatprep.subr.mxu0 0.0
    %981 = vmatpush1.msra.mxu0 0.0
    %982 = vmatprep.subr.mxu0 0.0
    %983 = vmatpush1.msra.mxu0 0.0
    %984 = vmatprep.subr.mxu0 0.0
    %985 = vmatpush1.msra.mxu0 0.0
    %986 = vmatprep.subr.mxu0 0.0
    %987 = vmatpush1.msra.mxu0 0.0
    %988 = vmatprep.subr.mxu0 0.0
    %989 = vmatpush1.msra.mxu0 0.0
    %990 = vmatprep.subr.mxu0 0.0
    %991 = vmatpush1.msra.mxu0 0.0
    %992 = vmatprep.mubr.f32.mxu0 0.0
    %993 = vmatmul.mubr.f32.gmra.mrb[0].mxu0 %v923
    %v994 = vpop.f32.mrb[0].mxu0
    %v995 = vadd.f32 0.0, %v994
    %v996 = vpop.f32.mrb[0].mxu0
    %997 = vmatprep.mubr.f32.mxu0 0.0
    %998 = vmatmul.mubr.f32.gmra.mrb[0].mxu0 %v926
    %v999 = vpop.f32.mrb[0].mxu0
    %v1000 = vadd.f32 0.0, %v999
    %v1001 = vpop.f32.mrb[0].mxu0
    %1002 = vdwg.mxu0
    %1005 = vrot.lane.b32.xlu0 %v587, 8
    %v1006 = vpop.permute.xlu0 %1005
    %1007 = vrot.lane.b32.xlu0 %v592, 8
    %v1008 = vpop.permute.xlu0 %1007
    %1013 = vrot.lane.b32.xlu0 %v791, 16
    %v1014 = vpop.permute.xlu0 %1013
    %1015 = vrot.lane.b32.xlu0 %v796, 16
    %v1016 = vpop.permute.xlu0 %1015
    %1021 = vrot.lane.b32.xlu0 %v995, 24
    %v1022 = vpop.permute.xlu0 %1021
    %1023 = vrot.lane.b32.xlu0 %v1000, 24
    %v1024 = vpop.permute.xlu0 %1023
    %v1027 = vsel %vm193, %v383, %v1006
    %v1028 = vsel %vm193, %v388, %v1008
    %v1029 = vsel %vm281, %v1027, %v1014
    %v1030 = vsel %vm281, %v1028, %v1016
    %vm1031 = vcmask 195584
    %v1032 = vsel %vm1031, %v1029, %v1022
    %v1033 = vsel %vm1031, %v1030, %v1024
    %v1035 = vsel %vm62, %v1032, 0
    %v1038 = vsel %vm62, %v1033, 0
    %1040 = vmatprep.subr.mxu0 0.0
    %1041 = vmatpush1.msra.mxu0 %v31
    %1042 = vmatprep.subr.mxu0 0.0
    %1043 = vmatpush1.msra.mxu0 %v32
    %1044 = vmatprep.subr.mxu0 0.0
    %1045 = vmatpush1.msra.mxu0 %v33
    %1046 = vmatprep.subr.mxu0 0.0
    %1047 = vmatpush1.msra.mxu0 %v34
    %1048 = vmatprep.subr.mxu0 0.0
    %1049 = vmatpush1.msra.mxu0 0.0
    %1050 = vmatprep.subr.mxu0 0.0
    %1051 = vmatpush1.msra.mxu0 0.0
    %1052 = vmatprep.subr.mxu0 0.0
    %1053 = vmatpush1.msra.mxu0 0.0
    %1054 = vmatprep.subr.mxu0 0.0
    %1055 = vmatpush1.msra.mxu0 0.0
    %1056 = vmatprep.subr.mxu0 0.0
    %1057 = vmatpush1.msra.mxu0 0.0
    %1058 = vmatprep.subr.mxu0 0.0
    %1059 = vmatpush1.msra.mxu0 0.0
    %1060 = vmatprep.subr.mxu0 0.0
    %1061 = vmatpush1.msra.mxu0 0.0
    %1062 = vmatprep.subr.mxu0 0.0
    %1063 = vmatpush1.msra.mxu0 0.0
    %1064 = vmatprep.subr.mxu0 0.0
    %1065 = vmatpush1.msra.mxu0 0.0
    %1066 = vmatprep.subr.mxu0 0.0
    %1067 = vmatpush1.msra.mxu0 0.0
    %1068 = vmatprep.subr.mxu0 0.0
    %1069 = vmatpush1.msra.mxu0 0.0
    %1070 = vmatprep.subr.mxu0 0.0
    %1071 = vmatpush1.msra.mxu0 0.0
    %1072 = vmatprep.subr.mxu0 0.0
    %1073 = vmatpush1.msra.mxu0 0.0
    %1074 = vmatprep.subr.mxu0 0.0
    %1075 = vmatpush1.msra.mxu0 0.0
    %1076 = vmatprep.subr.mxu0 0.0
    %1077 = vmatpush1.msra.mxu0 0.0
    %1078 = vmatprep.subr.mxu0 0.0
    %1079 = vmatpush1.msra.mxu0 0.0
    %1080 = vmatprep.subr.mxu0 0.0
    %1081 = vmatpush1.msra.mxu0 0.0
    %1082 = vmatprep.subr.mxu0 0.0
    %1083 = vmatpush1.msra.mxu0 0.0
    %1084 = vmatprep.subr.mxu0 0.0
    %1085 = vmatpush1.msra.mxu0 0.0
    %1086 = vmatprep.subr.mxu0 0.0
    %1087 = vmatpush1.msra.mxu0 0.0
    %1088 = vmatprep.subr.mxu0 0.0
    %1089 = vmatpush1.msra.mxu0 0.0
    %1090 = vmatprep.subr.mxu0 0.0
    %1091 = vmatpush1.msra.mxu0 0.0
    %1092 = vmatprep.subr.mxu0 0.0
    %1093 = vmatpush1.msra.mxu0 0.0
    %1094 = vmatprep.subr.mxu0 0.0
    %1095 = vmatpush1.msra.mxu0 0.0
    %1096 = vmatprep.subr.mxu0 0.0
    %1097 = vmatpush1.msra.mxu0 0.0
    %1098 = vmatprep.subr.mxu0 0.0
    %1099 = vmatpush1.msra.mxu0 0.0
    %1100 = vmatprep.subr.mxu0 0.0
    %1101 = vmatpush1.msra.mxu0 0.0
    %1102 = vmatprep.subr.mxu0 0.0
    %1103 = vmatpush1.msra.mxu0 0.0
    %1104 = vmatprep.mubr.f32.mxu0 0.0
    %1105 = vmatmul.mubr.f32.gmra.mrb[0].mxu0 %v1035
    %v1106 = vpop.f32.mrb[0].mxu0
    %v1107 = vadd.f32 0.0, %v1106
    %v1108 = vpop.f32.mrb[0].mxu0
    %1109 = vmatprep.mubr.f32.mxu0 0.0
    %1110 = vmatmul.mubr.f32.gmra.mrb[0].mxu0 %v1038
    %v1111 = vpop.f32.mrb[0].mxu0
    %v1112 = vadd.f32 0.0, %v1111
    %v1113 = vpop.f32.mrb[0].mxu0
    %1114 = vdwg.mxu0
    %v1115 = vadd.f32 %v25, %v1107
    %v1116 = vadd.f32 %v26, %v1112
    %v1117 = vlaneseq
    %v1118 = vshrl.u32 %v1117, 7
    %v1119 = vsub.s32 0, %v1118
    %v1120 = vrot.slane %v58, %v1119
    %v1121 = vadd.f32 %v1115, %v1120
    %v1122 = vadd.f32 %v1116, %v1120
    %v1123 = vsel %vm62, %v1121, 0.0
    %1124 = vadd.xlane.f32.xlu0 %v1123
    %v1125 = vpop.xlane.xlu0 %1124
    %v1126 = vsel %vm62, %v1122, 0.0
    %1127 = vadd.xlane.f32.xlu0 %v1126
    %v1128 = vpop.xlane.xlu0 %1127
    %v1129 = vmul.f32 %v1125, %v69
    %v1130 = vmul.f32 %v1128, %v69
    %v1131 = vsub.f32 %v1121, %v1129
    %v1132 = vsub.f32 %v1122, %v1130
    %v1133 = vmul.f32 %v1131, %v1131
    %v1134 = vmul.f32 %v1132, %v1132
    %v1135 = vsel %vm62, %v1133, 0.0
    %1136 = vadd.xlane.f32.xlu0 %v1135
    %v1137 = vpop.xlane.xlu0 %1136
    %v1138 = vsel %vm62, %v1134, 0.0
    %1139 = vadd.xlane.f32.xlu0 %v1138
    %v1140 = vpop.xlane.xlu0 %1139
    %v1141 = vmul.f32 %v1137, %v69
    %v1142 = vmul.f32 %v1140, %v69
    %v1143 = vadd.f32 %v1141, 1e-06
    %v1144 = vadd.f32 %v1142, 1e-06
    %v1145 = vrsqrt.pop %v1143
    %v1146 = vrsqrt.pop %v1144
    %v1147 = vmul.f32 %v1131, %v1145
    %v1148 = vmul.f32 %v1132, %v1146
    %v1149 = vlaneseq
    %v1150 = vshrl.u32 %v1149, 7
    %v1151 = vsub.s32 0, %v1150
    %v1152 = vrot.slane %v55, %v1151
    %v1153 = vmul.f32 %v1147, %v1152
    %v1154 = vmul.f32 %v1148, %v1152
    %v1155 = vlaneseq
    %v1156 = vshrl.u32 %v1155, 7
    %v1157 = vsub.s32 0, %v1156
    %v1158 = vrot.slane %v56, %v1157
    %v1159 = vadd.f32 %v1153, %v1158
    %v1160 = vadd.f32 %v1154, %v1158
    %v1161 = vlaneseq
    %v1162 = vshrl.u32 %v1161, 7
    %v1163 = vsub.s32 0, %v1162
    %v1164 = vrot.slane %v59, %v1163
    %v1166 = vsel %vm62, %v1159, 0
    %v1169 = vsel %vm62, %v1160, 0
    %1171 = vmatprep.subr.mxu0 0.0
    %1172 = vmatpush1.msra.mxu0 %v35
    %1173 = vmatprep.subr.mxu0 0.0
    %1174 = vmatpush1.msra.mxu0 %v36
    %1175 = vmatprep.subr.mxu0 0.0
    %1176 = vmatpush1.msra.mxu0 %v37
    %1177 = vmatprep.subr.mxu0 0.0
    %1178 = vmatpush1.msra.mxu0 %v38
    %1179 = vmatprep.subr.mxu0 0.0
    %1180 = vmatpush1.msra.mxu0 0.0
    %1181 = vmatprep.subr.mxu0 0.0
    %1182 = vmatpush1.msra.mxu0 0.0
    %1183 = vmatprep.subr.mxu0 0.0
    %1184 = vmatpush1.msra.mxu0 0.0
    %1185 = vmatprep.subr.mxu0 0.0
    %1186 = vmatpush1.msra.mxu0 0.0
    %1187 = vmatprep.subr.mxu0 0.0
    %1188 = vmatpush1.msra.mxu0 0.0
    %1189 = vmatprep.subr.mxu0 0.0
    %1190 = vmatpush1.msra.mxu0 0.0
    %1191 = vmatprep.subr.mxu0 0.0
    %1192 = vmatpush1.msra.mxu0 0.0
    %1193 = vmatprep.subr.mxu0 0.0
    %1194 = vmatpush1.msra.mxu0 0.0
    %1195 = vmatprep.subr.mxu0 0.0
    %1196 = vmatpush1.msra.mxu0 0.0
    %1197 = vmatprep.subr.mxu0 0.0
    %1198 = vmatpush1.msra.mxu0 0.0
    %1199 = vmatprep.subr.mxu0 0.0
    %1200 = vmatpush1.msra.mxu0 0.0
    %1201 = vmatprep.subr.mxu0 0.0
    %1202 = vmatpush1.msra.mxu0 0.0
    %1203 = vmatprep.subr.mxu0 0.0
    %1204 = vmatpush1.msra.mxu0 0.0
    %1205 = vmatprep.subr.mxu0 0.0
    %1206 = vmatpush1.msra.mxu0 0.0
    %1207 = vmatprep.subr.mxu0 0.0
    %1208 = vmatpush1.msra.mxu0 0.0
    %1209 = vmatprep.subr.mxu0 0.0
    %1210 = vmatpush1.msra.mxu0 0.0
    %1211 = vmatprep.subr.mxu0 0.0
    %1212 = vmatpush1.msra.mxu0 0.0
    %1213 = vmatprep.subr.mxu0 0.0
    %1214 = vmatpush1.msra.mxu0 0.0
    %1215 = vmatprep.subr.mxu0 0.0
    %1216 = vmatpush1.msra.mxu0 0.0
    %1217 = vmatprep.subr.mxu0 0.0
    %1218 = vmatpush1.msra.mxu0 0.0
    %1219 = vmatprep.subr.mxu0 0.0
    %1220 = vmatpush1.msra.mxu0 0.0
    %1221 = vmatprep.subr.mxu0 0.0
    %1222 = vmatpush1.msra.mxu0 0.0
    %1223 = vmatprep.subr.mxu0 0.0
    %1224 = vmatpush1.msra.mxu0 0.0
    %1225 = vmatprep.subr.mxu0 0.0
    %1226 = vmatpush1.msra.mxu0 0.0
    %1227 = vmatprep.subr.mxu0 0.0
    %1228 = vmatpush1.msra.mxu0 0.0
    %1229 = vmatprep.subr.mxu0 0.0
    %1230 = vmatpush1.msra.mxu0 0.0
    %1231 = vmatprep.subr.mxu0 0.0
    %1232 = vmatpush1.msra.mxu0 0.0
    %1233 = vmatprep.subr.mxu0 0.0
    %1234 = vmatpush1.msra.mxu0 0.0
    %1235 = vmatprep.mubr.f32.mxu0 0.0
    %1236 = vmatmul.mubr.f32.gmra.mrb[0].mxu0 %v1166
    %v1237 = vpop.f32.mrb[0].mxu0
    %v1238 = vadd.f32 %v1164, %v1237
    %v1239 = vpop.f32.mrb[0].mxu0
    %1240 = vmatprep.mubr.f32.mxu0 0.0
    %1241 = vmatmul.mubr.f32.gmra.mrb[0].mxu0 %v1169
    %v1242 = vpop.f32.mrb[0].mxu0
    %v1243 = vadd.f32 %v1164, %v1242
    %v1244 = vpop.f32.mrb[0].mxu0
    %1245 = vdwg.mxu0
    %v1246 = vmax.f32 %v1238, 0.0
    %v1247 = vmax.f32 %v1243, 0.0
    %vm1248 = vcmask 523264
    %v1250 = vsel %vm1248, %v1246, 0
    %v1253 = vsel %vm1248, %v1247, 0
    %1255 = vmatprep.subr.mxu0 0.0
    %1256 = vmatpush1.msra.mxu0 %v39
    %1257 = vmatprep.subr.mxu0 0.0
    %1258 = vmatpush1.msra.mxu0 %v40
    %1259 = vmatprep.subr.mxu0 0.0
    %1260 = vmatpush1.msra.mxu0 %v41
    %1261 = vmatprep.subr.mxu0 0.0
    %1262 = vmatpush1.msra.mxu0 %v42
    %1263 = vmatprep.subr.mxu0 0.0
    %1264 = vmatpush1.msra.mxu0 %v43
    %1265 = vmatprep.subr.mxu0 0.0
    %1266 = vmatpush1.msra.mxu0 %v44
    %1267 = vmatprep.subr.mxu0 0.0
    %1268 = vmatpush1.msra.mxu0 %v45
    %1269 = vmatprep.subr.mxu0 0.0
    %1270 = vmatpush1.msra.mxu0 %v46
    %1271 = vmatprep.subr.mxu0 0.0
    %1272 = vmatpush1.msra.mxu0 0.0
    %1273 = vmatprep.subr.mxu0 0.0
    %1274 = vmatpush1.msra.mxu0 0.0
    %1275 = vmatprep.subr.mxu0 0.0
    %1276 = vmatpush1.msra.mxu0 0.0
    %1277 = vmatprep.subr.mxu0 0.0
    %1278 = vmatpush1.msra.mxu0 0.0
    %1279 = vmatprep.subr.mxu0 0.0
    %1280 = vmatpush1.msra.mxu0 0.0
    %1281 = vmatprep.subr.mxu0 0.0
    %1282 = vmatpush1.msra.mxu0 0.0
    %1283 = vmatprep.subr.mxu0 0.0
    %1284 = vmatpush1.msra.mxu0 0.0
    %1285 = vmatprep.subr.mxu0 0.0
    %1286 = vmatpush1.msra.mxu0 0.0
    %1287 = vmatprep.subr.mxu0 0.0
    %1288 = vmatpush1.msra.mxu0 0.0
    %1289 = vmatprep.subr.mxu0 0.0
    %1290 = vmatpush1.msra.mxu0 0.0
    %1291 = vmatprep.subr.mxu0 0.0
    %1292 = vmatpush1.msra.mxu0 0.0
    %1293 = vmatprep.subr.mxu0 0.0
    %1294 = vmatpush1.msra.mxu0 0.0
    %1295 = vmatprep.subr.mxu0 0.0
    %1296 = vmatpush1.msra.mxu0 0.0
    %1297 = vmatprep.subr.mxu0 0.0
    %1298 = vmatpush1.msra.mxu0 0.0
    %1299 = vmatprep.subr.mxu0 0.0
    %1300 = vmatpush1.msra.mxu0 0.0
    %1301 = vmatprep.subr.mxu0 0.0
    %1302 = vmatpush1.msra.mxu0 0.0
    %1303 = vmatprep.subr.mxu0 0.0
    %1304 = vmatpush1.msra.mxu0 0.0
    %1305 = vmatprep.subr.mxu0 0.0
    %1306 = vmatpush1.msra.mxu0 0.0
    %1307 = vmatprep.subr.mxu0 0.0
    %1308 = vmatpush1.msra.mxu0 0.0
    %1309 = vmatprep.subr.mxu0 0.0
    %1310 = vmatpush1.msra.mxu0 0.0
    %1311 = vmatprep.subr.mxu0 0.0
    %1312 = vmatpush1.msra.mxu0 0.0
    %1313 = vmatprep.subr.mxu0 0.0
    %1314 = vmatpush1.msra.mxu0 0.0
    %1315 = vmatprep.subr.mxu0 0.0
    %1316 = vmatpush1.msra.mxu0 0.0
    %1317 = vmatprep.subr.mxu0 0.0
    %1318 = vmatpush1.msra.mxu0 0.0
    %1319 = vmatprep.mubr.f32.mxu0 0.0
    %1320 = vmatmul.mubr.f32.gmra.mrb[0].mxu0 %v1250
    %v1321 = vpop.f32.mrb[0].mxu0
    %v1322 = vadd.f32 0.0, %v1321
    %v1323 = vpop.f32.mrb[0].mxu0
    %1324 = vmatprep.mubr.f32.mxu0 0.0
    %1325 = vmatmul.mubr.f32.gmra.mrb[0].mxu0 %v1253
    %v1326 = vpop.f32.mrb[0].mxu0
    %v1327 = vadd.f32 0.0, %v1326
    %v1328 = vpop.f32.mrb[0].mxu0
    %1329 = vdwg.mxu0
    %v1330 = vadd.f32 %v1121, %v1322
    %v1331 = vadd.f32 %v1122, %v1327
    %v1332 = vlaneseq
    %v1333 = vshrl.u32 %v1332, 7
    %v1334 = vsub.s32 0, %v1333
    %v1335 = vrot.slane %v60, %v1334
    %v1336 = vadd.f32 %v1330, %v1335
    %v1337 = vadd.f32 %v1331, %v1335
    %v1338 = vlaneseq
    %v1339 = vshrl.u32 %v1338, 7
    %v1340 = vsub.s32 0, %v1339
    %v1341 = vrot.slane %v61, %v1340
    %v1343 = vsel %vm62, %v1336, 0
    %v1346 = vsel %vm62, %v1337, 0
    %1348 = vmatprep.subr.mxu0 0.0
    %1349 = vmatpush1.msra.mxu0 %v47
    %1350 = vmatprep.subr.mxu0 0.0
    %1351 = vmatpush1.msra.mxu0 %v48
    %1352 = vmatprep.subr.mxu0 0.0
    %1353 = vmatpush1.msra.mxu0 %v49
    %1354 = vmatprep.subr.mxu0 0.0
    %1355 = vmatpush1.msra.mxu0 %v50
    %1356 = vmatprep.subr.mxu0 0.0
    %1357 = vmatpush1.msra.mxu0 0.0
    %1358 = vmatprep.subr.mxu0 0.0
    %1359 = vmatpush1.msra.mxu0 0.0
    %1360 = vmatprep.subr.mxu0 0.0
    %1361 = vmatpush1.msra.mxu0 0.0
    %1362 = vmatprep.subr.mxu0 0.0
    %1363 = vmatpush1.msra.mxu0 0.0
    %1364 = vmatprep.subr.mxu0 0.0
    %1365 = vmatpush1.msra.mxu0 0.0
    %1366 = vmatprep.subr.mxu0 0.0
    %1367 = vmatpush1.msra.mxu0 0.0
    %1368 = vmatprep.subr.mxu0 0.0
    %1369 = vmatpush1.msra.mxu0 0.0
    %1370 = vmatprep.subr.mxu0 0.0
    %1371 = vmatpush1.msra.mxu0 0.0
    %1372 = vmatprep.subr.mxu0 0.0
    %1373 = vmatpush1.msra.mxu0 0.0
    %1374 = vmatprep.subr.mxu0 0.0
    %1375 = vmatpush1.msra.mxu0 0.0
    %1376 = vmatprep.subr.mxu0 0.0
    %1377 = vmatpush1.msra.mxu0 0.0
    %1378 = vmatprep.subr.mxu0 0.0
    %1379 = vmatpush1.msra.mxu0 0.0
    %1380 = vmatprep.subr.mxu0 0.0
    %1381 = vmatpush1.msra.mxu0 0.0
    %1382 = vmatprep.subr.mxu0 0.0
    %1383 = vmatpush1.msra.mxu0 0.0
    %1384 = vmatprep.subr.mxu0 0.0
    %1385 = vmatpush1.msra.mxu0 0.0
    %1386 = vmatprep.subr.mxu0 0.0
    %1387 = vmatpush1.msra.mxu0 0.0
    %1388 = vmatprep.subr.mxu0 0.0
    %1389 = vmatpush1.msra.mxu0 0.0
    %1390 = vmatprep.subr.mxu0 0.0
    %1391 = vmatpush1.msra.mxu0 0.0
    %1392 = vmatprep.subr.mxu0 0.0
    %1393 = vmatpush1.msra.mxu0 0.0
    %1394 = vmatprep.subr.mxu0 0.0
    %1395 = vmatpush1.msra.mxu0 0.0
    %1396 = vmatprep.subr.mxu0 0.0
    %1397 = vmatpush1.msra.mxu0 0.0
    %1398 = vmatprep.subr.mxu0 0.0
    %1399 = vmatpush1.msra.mxu0 0.0
    %1400 = vmatprep.subr.mxu0 0.0
    %1401 = vmatpush1.msra.mxu0 0.0
    %1402 = vmatprep.subr.mxu0 0.0
    %1403 = vmatpush1.msra.mxu0 0.0
    %1404 = vmatprep.subr.mxu0 0.0
    %1405 = vmatpush1.msra.mxu0 0.0
    %1406 = vmatprep.subr.mxu0 0.0
    %1407 = vmatpush1.msra.mxu0 0.0
    %1408 = vmatprep.subr.mxu0 0.0
    %1409 = vmatpush1.msra.mxu0 0.0
    %1410 = vmatprep.subr.mxu0 0.0
    %1411 = vmatpush1.msra.mxu0 0.0
    %1412 = vmatprep.mubr.f32.mxu0 0.0
    %1413 = vmatmul.mubr.f32.gmra.mrb[0].mxu0 %v1343
    %v1414 = vpop.f32.mrb[0].mxu0
    %v1415 = vadd.f32 %v1341, %v1414
    %v1416 = vpop.f32.mrb[0].mxu0
    %1417 = vmatprep.mubr.f32.mxu0 0.0
    %1418 = vmatmul.mubr.f32.gmra.mrb[0].mxu0 %v1346
    %v1419 = vpop.f32.mrb[0].mxu0
    %v1420 = vadd.f32 %v1341, %v1419
    %v1421 = vpop.f32.mrb[0].mxu0
    %1422 = vdwg.mxu0
    %1423 = vst [vmem:[%s2] sm:$0xff] %v1415
    %1424 = vst [vmem:[%s2 + $0x8] sm:$0xff] %v1420
    // Predicated region
    $region14: #{self_attn_forward.1} parent=1 // pred_check
      _
    $region15: #{self_attn_forward.1} parent=1 // pred_check_branch
      %1426 = sbr.rel (0) target = $region17
    $region16: #{self_attn_forward.1} parent=1 // pred_region
      _
    $region17: #{self_attn_forward.1} parent=1 // pred_fallthru
      _
    // Predicated region
    $region18: #{self_attn_forward.1} parent=1 // pred_check
      _
    $region19: #{self_attn_forward.1} parent=1 // pred_check_branch
      %1428 = sbr.rel (0) target = $region21
    $region20: #{self_attn_forward.1} parent=1 // pred_region
      _
    $region21: #{self_attn_forward.1} parent=1 // pred_fallthru
      _
    %1429 = vsyncpa [#allocation3], 1

</llo_original>
